<compile_context>
chip_gen: v6e
topology: v6e:2x2x1
jax: 0.10.0
libtpu: 0.0.40
codegen_flags: <defaults>
</compile_context>

<pallas_src>
import functools

import jax
import jax.numpy as jnp
import numpy as np
from jax.experimental import pallas as pl
from jax.experimental.pallas import tpu as pltpu

BN_EPS = 1e-5


def aux_head_kernel(x_ref, wp_ref, b1_ref, w2_ref, b2_ref, wc_ref, bc_ref, out_ref):
    # x_ref:  (TN, C*64)   f32   flattened NCHW input tile (row index = c*64 + h*8 + w)
    # wp_ref: (C*64, 512)  bf16  fused (avgpool5/s3 x 1x1-conv x BN1-scale) weight
    # b1_ref: (1, 512)     f32   BN1 folded shift, tiled over the 4 pooled positions
    # w2_ref: (512, 768)   bf16  2x2-conv weight (x BN2-scale), K = pos*128 + cin
    # b2_ref: (1, 768)     f32   BN2 folded shift
    # wc_ref: (768, NCpad) bf16  classifier weight (transposed, lane-padded)
    # bc_ref: (1, NCpad)   f32   classifier bias (lane-padded)
    x = jnp.maximum(x_ref[...], 0.0).astype(jnp.bfloat16)             # in-kernel ReLU + cast
    # ReLU -> AvgPool(5,3) -> 1x1 conv -> BN1 scale, fused into one (C*64 -> 512) matmul.
    h = jnp.dot(x, wp_ref[...], preferred_element_type=jnp.float32)   # (TN, 512)
    h = jnp.maximum(h + b1_ref[...], 0.0)                             # BN1 shift + ReLU
    # 2x2 conv over the 2x2 pooled map (BN2 scale folded) == single (512 -> 768) matmul.
    z = jnp.dot(h.astype(jnp.bfloat16), w2_ref[...],
                preferred_element_type=jnp.float32)                   # (TN, 768)
    z = jnp.maximum(z + b2_ref[...], 0.0)                             # BN2 shift + ReLU
    out_ref[...] = (jnp.dot(z.astype(jnp.bfloat16), wc_ref[...],
                            preferred_element_type=jnp.float32) + bc_ref[...])


def _round_up(v, m):
    return (v + m - 1) // m * m


def _fold_bn(gamma, beta, mean, var):
    scale = gamma * jax.lax.rsqrt(var + BN_EPS)
    shift = beta - mean * scale
    return scale, shift


def prepare_params(params):
    """One-time weight preparation, hoisted out of the per-call forward path."""
    C = params["w1"].shape[1]
    num_classes = params["wc"].shape[0]
    NC_pad = _round_up(num_classes, 128)

    # AvgPool2d(5, stride=3) pooling matrix: P[p, hw] = 1/25 iff pixel hw lies in pooled
    # window p (p = 2*i + j).  count_include_pad is moot: no padding, windows fully inside.
    P = np.zeros((2, 2, 8, 8), np.float32)
    for i in range(2):
        for j in range(2):
            P[i, j, 3 * i:3 * i + 5, 3 * j:3 * j + 5] = 1.0 / 25.0
    P = jnp.asarray(P.reshape(4, 64))                                  # (pos, hw)

    s1, b1 = _fold_bn(params["bn1_gamma"], params["bn1_beta"],
                      params["bn1_mean"], params["bn1_var"])
    s2, b2 = _fold_bn(params["bn2_gamma"], params["bn2_beta"],
                      params["bn2_mean"], params["bn2_var"])

    # Fused pool + 1x1 conv weight with K ordered to match a flat NCHW row (c*64 + hw):
    #   wp[c*64 + hw, p*128 + k] = P[p, hw] * w1[k, c] * bn1_scale[k]
    w1 = jnp.transpose(params["w1"][:, :, 0, 0])                       # (C, 128)
    wp = jnp.einsum("ps,ck->cspk", P, w1).reshape(C * 64, 512)
    wp = wp * jnp.tile(s1, 4)[None, :]                                 # fold BN1 scale (f32)
    b1 = jnp.tile(b1, 4)[None, :]                                      # (1, 512)

    # 2x2 conv weight: (768,128,2,2) -> (kh,kw,cin,out) -> (512, 768); K = pos*128 + cin.
    w2 = jnp.transpose(params["w2"], (2, 3, 1, 0)).reshape(512, 768)
    w2 = w2 * s2[None, :]                                              # fold BN2 scale (f32)
    b2 = b2[None, :]                                                   # (1, 768)

    # Classifier, zero-padded to a lane-dense (768, NC_pad) slab.
    wc = jnp.zeros((768, NC_pad), jnp.float32).at[:, :num_classes].set(
        jnp.transpose(params["wc"]))
    bc = jnp.zeros((1, NC_pad), jnp.float32).at[:, :num_classes].set(
        params["bc"][None, :])

    return {
        "wp": wp.astype(jnp.bfloat16), "b1": b1,
        "w2": w2.astype(jnp.bfloat16), "b2": b2,
        "wc": wc.astype(jnp.bfloat16), "bc": bc,
        "num_classes": num_classes,
    }


def _chip_config(N):
    """Chip-aware batch tile, VMEM budget and weight-buffering policy."""
    kind = ""
    try:
        kind = jax.devices()[0].device_kind.lower()
    except Exception:
        pass
    if "v7" in kind:
        # 64 MiB physical VMEM, 2 TensorCores: modest tiles, single-buffered resident
        # weights, and a batch grid split so both TCs get work.
        tn_cap, vmem_limit, single_buf_w, min_steps, m_align = 256, 48 << 20, True, 2, 256
    elif "v6" in kind:
        tn_cap, vmem_limit, single_buf_w, min_steps, m_align = 1024, 96 << 20, False, 1, 256
    elif "v5 lite" in kind or "v5e" in kind:
        tn_cap, vmem_limit, single_buf_w, min_steps, m_align = 512, 64 << 20, False, 1, 128
    else:  # unknown / v4 / v5p: safe middle ground
        tn_cap, vmem_limit, single_buf_w, min_steps, m_align = 512, 64 << 20, False, 1, 128

    TN = min(tn_cap, _round_up(N, 16))
    if min_steps > 1:
        TN = min(TN, max(16, _round_up(-(-_round_up(N, 16) // min_steps), 16)))
    if TN >= m_align:                    # keep M a multiple of the MXU systolic height
        TN = (TN // m_align) * m_align
    return TN, vmem_limit, single_buf_w


@functools.partial(jax.jit, static_argnames=("num_classes",))
def _aux_head_call(x_nchw, wp, b1, w2, b2, wc, bc, *, num_classes):
    N, C, H, W = x_nchw.shape
    assert (H, W) == (8, 8), "AuxiliaryHeadCIFAR assumes 8x8 input"
    K = C * 64
    NC_pad = wc.shape[1]

    TN, vmem_limit, single_buf_w = _chip_config(N)
    N_pad = _round_up(N, TN)

    # Flat NCHW view -- a free reshape; no transpose / relayout / cast pass over x.
    x_flat = x_nchw.astype(jnp.float32).reshape(N, K)
    if N_pad != N:
        x_flat = jnp.pad(x_flat, ((0, N_pad - N), (0, 0)))

    grid = (N_pad // TN,)
    const = lambda i: (0, 0)
    # Resident operands (constant index maps): single-buffer on VMEM-tight chips (v7x).
    wkw = dict(pipeline_mode=pl.Buffered(1)) if single_buf_w else {}

    flops = 2 * N_pad * (K * 512 + 512 * 768 + 768 * NC_pad)
    bytes_accessed = (x_flat.size * 4 + (wp.size + w2.size + wc.size) * 2
                      + (b1.size + b2.size + bc.size) * 4 + N_pad * NC_pad * 4)

    out = pl.pallas_call(
        aux_head_kernel,
        out_shape=jax.ShapeDtypeStruct((N_pad, NC_pad), jnp.float32),
        grid=grid,
        in_specs=[
            pl.BlockSpec((TN, K), lambda i: (i, 0)),        # x: tiled over batch
            pl.BlockSpec((K, 512), const, **wkw),           # fused pool+1x1 (+BN1 scale)
            pl.BlockSpec((1, 512), const, **wkw),           # BN1 shift
            pl.BlockSpec((512, 768), const, **wkw),         # 2x2 conv (+BN2 scale)
            pl.BlockSpec((1, 768), const, **wkw),           # BN2 shift
            pl.BlockSpec((768, NC_pad), const, **wkw),      # classifier weight
            pl.BlockSpec((1, NC_pad), const, **wkw),        # classifier bias
        ],
        out_specs=pl.BlockSpec((TN, NC_pad), lambda i: (i, 0)),
        compiler_params=pltpu.CompilerParams(
            dimension_semantics=("parallel",),
            vmem_limit_bytes=vmem_limit),
        cost_estimate=pl.CostEstimate(flops=flops, transcendentals=0,
                                      bytes_accessed=bytes_accessed),
    )(x_flat, wp, b1, w2, b2, wc, bc)

    return out[:N, :num_classes]


def aux_head_forward(x_nchw, prepped):
    return _aux_head_call(x_nchw, prepped["wp"], prepped["b1"], prepped["w2"],
                          prepped["b2"], prepped["wc"], prepped["bc"],
                          num_classes=prepped["num_classes"])


def init_params(key, C, num_classes):
    ks = jax.random.split(key, 12)
    p = {}
    p["w1"] = 0.1 * jax.random.normal(ks[0], (128, C, 1, 1), jnp.float32)
    p["bn1_gamma"] = 1.0 + 0.1 * jax.random.normal(ks[1], (128,), jnp.float32)
    p["bn1_beta"] = 0.1 * jax.random.normal(ks[2], (128,), jnp.float32)
    p["bn1_mean"] = 0.1 * jax.random.normal(ks[3], (128,), jnp.float32)
    p["bn1_var"] = jax.random.uniform(ks[4], (128,), jnp.float32, 0.5, 1.5)
    p["w2"] = 0.05 * jax.random.normal(ks[5], (768, 128, 2, 2), jnp.float32)
    p["bn2_gamma"] = 1.0 + 0.1 * jax.random.normal(ks[6], (768,), jnp.float32)
    p["bn2_beta"] = 0.1 * jax.random.normal(ks[7], (768,), jnp.float32)
    p["bn2_mean"] = 0.1 * jax.random.normal(ks[8], (768,), jnp.float32)
    p["bn2_var"] = jax.random.uniform(ks[9], (768,), jnp.float32, 0.5, 1.5)
    p["wc"] = 0.05 * jax.random.normal(ks[10], (num_classes, 768), jnp.float32)
    p["bc"] = 0.1 * jax.random.normal(ks[11], (num_classes,), jnp.float32)
    return p


def ref_forward(x_nchw, p):
    """Pure-JAX f32 reference mirroring the PyTorch forward (inference-mode BN)."""
    hi = jax.lax.Precision.HIGHEST
    xr = jnp.maximum(x_nchw, 0.0)
    rows = []
    for i in range(2):
        cols = []
        for j in range(2):
            cols.append(jnp.mean(xr[:, :, 3 * i:3 * i + 5, 3 * j:3 * j + 5],
                                 axis=(2, 3)))
        rows.append(jnp.stack(cols, axis=-1))
    pooled = jnp.stack(rows, axis=-2)                                   # (N,C,2,2)

    def bn(t, g, b, m, v):
        sh = (1, -1) + (1,) * (t.ndim - 2)
        return ((t - m.reshape(sh)) * jax.lax.rsqrt(v.reshape(sh) + BN_EPS)
                * g.reshape(sh) + b.reshape(sh))

    y = jnp.einsum("kc,nchw->nkhw", p["w1"][:, :, 0, 0], pooled, precision=hi)
    y = jnp.maximum(bn(y, p["bn1_gamma"], p["bn1_beta"],
                       p["bn1_mean"], p["bn1_var"]), 0.0)
    z = jnp.einsum("ocij,ncij->no", p["w2"], y, precision=hi)
    z = jnp.maximum(bn(z, p["bn2_gamma"], p["bn2_beta"],
                       p["bn2_mean"], p["bn2_var"]), 0.0)
    return jnp.dot(z, p["wc"].T, precision=hi) + p["bc"]


if __name__ == "__main__":
    key = jax.random.PRNGKey(0)
    kx, kp = jax.random.split(key)
    N, C, NUM_CLASSES = 2, 4, 10
    x = jax.random.normal(kx, (N, C, 8, 8), jnp.float32)
    params = init_params(kp, C, NUM_CLASSES)

    prepped = prepare_params(params)        # one-time weight prep (hoisted off hot path)
    out = aux_head_forward(x, prepped)
    out = jax.block_until_ready(out)
    assert out.shape == (N, NUM_CLASSES)

    ref = ref_forward(x, params)
    # bf16 matmul operands (f32 accumulation) -> loosened tolerance vs f32 reference.
    np.testing.assert_allclose(np.asarray(out), np.asarray(ref),
                               rtol=2e-2, atol=2e-2)
    print("KERNEL_OK")
</pallas_src>

<mosaic_0001>
module attributes {stable_mosaic.version = 11 : i64} {
  func.func @aux_head_kernel(%arg0: i32, %arg1: memref<16x256xf32, #tpu.memory_space<vmem>>, %arg2: memref<256x512xbf16, #tpu.memory_space<vmem>>, %arg3: memref<1x512xf32, #tpu.memory_space<vmem>>, %arg4: memref<512x768xbf16, #tpu.memory_space<vmem>>, %arg5: memref<1x768xf32, #tpu.memory_space<vmem>>, %arg6: memref<768x128xbf16, #tpu.memory_space<vmem>>, %arg7: memref<1x128xf32, #tpu.memory_space<vmem>>, %arg8: memref<16x128xf32, #tpu.memory_space<vmem>>) attributes {dimension_semantics = [#tpu.dimension_semantics<parallel>], iteration_bounds = array<i64: 1>, scalar_prefetch = 0 : i64, scratch_operands = 0 : i64, tpu.core_type = #tpu.core_type<tc>, window_params = [{transform_indices = @transform_0, window_bounds = array<i64: 16, 256>}, {pipeline_mode = #tpu.pipeline_mode<synchronous>, transform_indices = @transform_1, window_bounds = array<i64: 256, 512>}, {pipeline_mode = #tpu.pipeline_mode<synchronous>, transform_indices = @transform_2, window_bounds = array<i64: 1, 512>}, {pipeline_mode = #tpu.pipeline_mode<synchronous>, transform_indices = @transform_3, window_bounds = array<i64: 512, 768>}, {pipeline_mode = #tpu.pipeline_mode<synchronous>, transform_indices = @transform_4, window_bounds = array<i64: 1, 768>}, {pipeline_mode = #tpu.pipeline_mode<synchronous>, transform_indices = @transform_5, window_bounds = array<i64: 768, 128>}, {pipeline_mode = #tpu.pipeline_mode<synchronous>, transform_indices = @transform_6, window_bounds = array<i64: 1, 128>}, {transform_indices = @transform_7, window_bounds = array<i64: 16, 128>}]} {
    %c0 = arith.constant 0 : index
    %c0_0 = arith.constant 0 : index
    %0 = vector.load %arg1[%c0, %c0_0] : memref<16x256xf32, #tpu.memory_space<vmem>>, vector<16x256xf32>
    %cst = arith.constant 0.000000e+00 : f32
    %1 = vector.broadcast %cst : f32 to vector<16x256xf32>
    %2 = arith.maximumf %0, %1 : vector<16x256xf32>
    %3 = arith.truncf %2 : vector<16x256xf32> to vector<16x256xbf16>
    %c0_1 = arith.constant 0 : index
    %c0_2 = arith.constant 0 : index
    %4 = vector.load %arg2[%c0_1, %c0_2] : memref<256x512xbf16, #tpu.memory_space<vmem>>, vector<256x512xbf16>
    %cst_3 = arith.constant dense<0.000000e+00> : vector<16x512xf32>
    %5 = tpu.matmul %3, %4, %cst_3 {dimension_numbers = #tpu.dot_dimension_numbers<[1], [0], [0], [1], [0, 0, 1, 1], [], []>} : vector<16x256xbf16>, vector<256x512xbf16>, vector<16x512xf32> -> vector<16x512xf32>
    %c0_4 = arith.constant 0 : index
    %c0_5 = arith.constant 0 : index
    %6 = vector.load %arg3[%c0_4, %c0_5] : memref<1x512xf32, #tpu.memory_space<vmem>>, vector<1x512xf32>
    %7 = vector.broadcast %6 : vector<1x512xf32> to vector<16x512xf32>
    %8 = arith.addf %5, %7 : vector<16x512xf32>
    %cst_6 = arith.constant 0.000000e+00 : f32
    %9 = vector.broadcast %cst_6 : f32 to vector<16x512xf32>
    %10 = arith.maximumf %8, %9 : vector<16x512xf32>
    %11 = arith.truncf %10 : vector<16x512xf32> to vector<16x512xbf16>
    %c0_7 = arith.constant 0 : index
    %c0_8 = arith.constant 0 : index
    %12 = vector.load %arg4[%c0_7, %c0_8] : memref<512x768xbf16, #tpu.memory_space<vmem>>, vector<512x768xbf16>
    %cst_9 = arith.constant dense<0.000000e+00> : vector<16x768xf32>
    %13 = tpu.matmul %11, %12, %cst_9 {dimension_numbers = #tpu.dot_dimension_numbers<[1], [0], [0], [1], [0, 0, 1, 1], [], []>} : vector<16x512xbf16>, vector<512x768xbf16>, vector<16x768xf32> -> vector<16x768xf32>
    %c0_10 = arith.constant 0 : index
    %c0_11 = arith.constant 0 : index
    %14 = vector.load %arg5[%c0_10, %c0_11] : memref<1x768xf32, #tpu.memory_space<vmem>>, vector<1x768xf32>
    %15 = vector.broadcast %14 : vector<1x768xf32> to vector<16x768xf32>
    %16 = arith.addf %13, %15 : vector<16x768xf32>
    %cst_12 = arith.constant 0.000000e+00 : f32
    %17 = vector.broadcast %cst_12 : f32 to vector<16x768xf32>
    %18 = arith.maximumf %16, %17 : vector<16x768xf32>
    %19 = arith.truncf %18 : vector<16x768xf32> to vector<16x768xbf16>
    %c0_13 = arith.constant 0 : index
    %c0_14 = arith.constant 0 : index
    %20 = vector.load %arg6[%c0_13, %c0_14] : memref<768x128xbf16, #tpu.memory_space<vmem>>, vector<768x128xbf16>
    %cst_15 = arith.constant dense<0.000000e+00> : vector<16x128xf32>
    %21 = tpu.matmul %19, %20, %cst_15 {dimension_numbers = #tpu.dot_dimension_numbers<[1], [0], [0], [1], [0, 0, 1, 1], [], []>} : vector<16x768xbf16>, vector<768x128xbf16>, vector<16x128xf32> -> vector<16x128xf32>
    %c0_16 = arith.constant 0 : index
    %c0_17 = arith.constant 0 : index
    %22 = vector.load %arg7[%c0_16, %c0_17] : memref<1x128xf32, #tpu.memory_space<vmem>>, vector<1x128xf32>
    %23 = vector.broadcast %22 : vector<1x128xf32> to vector<16x128xf32>
    %24 = arith.addf %21, %23 : vector<16x128xf32>
    %c0_18 = arith.constant 0 : index
    %c0_19 = arith.constant 0 : index
    %25 = vector.load %arg8[%c0_18, %c0_19] : memref<16x128xf32, #tpu.memory_space<vmem>>, vector<16x128xf32>
    tpu.vector_store %arg8[%c0_18, %c0_19], %24 {strides = array<i32>} : memref<16x128xf32, #tpu.memory_space<vmem>>, vector<16x128xf32>,
    return
  }
  func.func @transform_0(%arg0: i32) -> (i32, i32) {
    %c0_i32 = arith.constant 0 : i32
    %c0_i32_0 = arith.constant 0 : i32
    return %arg0, %c0_i32 : i32, i32
  }
  func.func @transform_1(%arg0: i32) -> (i32, i32) {
    %c0_i32 = arith.constant 0 : i32
    %c0_i32_0 = arith.constant 0 : i32
    %c0_i32_1 = arith.constant 0 : i32
    return %c0_i32, %c0_i32_0 : i32, i32
  }
  func.func @transform_2(%arg0: i32) -> (i32, i32) {
    %c0_i32 = arith.constant 0 : i32
    %c0_i32_0 = arith.constant 0 : i32
    %c0_i32_1 = arith.constant 0 : i32
    return %c0_i32, %c0_i32_0 : i32, i32
  }
  func.func @transform_3(%arg0: i32) -> (i32, i32) {
    %c0_i32 = arith.constant 0 : i32
    %c0_i32_0 = arith.constant 0 : i32
    %c0_i32_1 = arith.constant 0 : i32
    return %c0_i32, %c0_i32_0 : i32, i32
  }
  func.func @transform_4(%arg0: i32) -> (i32, i32) {
    %c0_i32 = arith.constant 0 : i32
    %c0_i32_0 = arith.constant 0 : i32
    %c0_i32_1 = arith.constant 0 : i32
    return %c0_i32, %c0_i32_0 : i32, i32
  }
  func.func @transform_5(%arg0: i32) -> (i32, i32) {
    %c0_i32 = arith.constant 0 : i32
    %c0_i32_0 = arith.constant 0 : i32
    %c0_i32_1 = arith.constant 0 : i32
    return %c0_i32, %c0_i32_0 : i32, i32
  }
  func.func @transform_6(%arg0: i32) -> (i32, i32) {
    %c0_i32 = arith.constant 0 : i32
    %c0_i32_0 = arith.constant 0 : i32
    %c0_i32_1 = arith.constant 0 : i32
    return %c0_i32, %c0_i32_0 : i32, i32
  }
  func.func @transform_7(%arg0: i32) -> (i32, i32) {
    %c0_i32 = arith.constant 0 : i32
    %c0_i32_0 = arith.constant 0 : i32
    return %arg0, %c0_i32 : i32, i32
  }
}

</mosaic_0001>

<llo_original>
// kernel: _aux_head_call.1
$region0: #{_aux_head_call.1}
  #allocation0 [shape = 'u32[]', space=smem, size = 0x4, offset = 0x4, fixed_abs, tag = 'smem constant byte address 0x4 - core index']
  #allocation1 [shape = 'u32[144,128]{1,0:T(1,128)}', space=vmem, size = 0x12000, scoped, tag = 'internal scratch']
  %s0 = inlined_call_operand.vmem [shape: f32[16,256], index: 0, kind: input, shape index: {}]
  %s1 = inlined_call_operand.hbm [shape: bf16[256,512], index: 1, kind: input, shape index: {}]
  %s2 = inlined_call_operand.vmem [shape: f32[1,512], index: 2, kind: input, shape index: {}]
  %s3 = inlined_call_operand.hbm [shape: bf16[512,768], index: 3, kind: input, shape index: {}]
  %s4 = inlined_call_operand.vmem [shape: f32[1,768], index: 4, kind: input, shape index: {}]
  %s5 = inlined_call_operand.hbm [shape: bf16[768,128], index: 5, kind: input, shape index: {}]
  %s6 = inlined_call_operand.vmem [shape: f32[1,128], index: 6, kind: input, shape index: {}]
  %s7 = inlined_call_operand.vmem [shape: f32[16,128], index: 7, kind: output, shape index: {}]
  %s8 = sld [smem:[#allocation0]]
  $region50: #{_aux_head_call.1} parent=0
    _
  %s10 = ssub.s32 1, %s8
  %s11 = scalar_select 0, %s10, %s8
  $region1: #{_aux_head_call.1} parent=0
    #allocation2 [shape = 'u8[262144]{0}', space=vmem, size = 0x40000, scoped, tag = 'input window, operand 1, single buffered']
    #allocation3 [shape = 's32[1]{0}', space=sflag, size = 0x4, scoped, tag = 'scoped memory for _aux_head_call.1']
    #allocation4 [shape = 'u8[786432]{0}', space=vmem, size = 0xc0000, scoped, tag = 'input window, operand 3, single buffered']
    #allocation5 [shape = 's32[1]{0}', space=sflag, size = 0x4, scoped, tag = 'scoped memory for _aux_head_call.1']
    #allocation6 [shape = 'u8[196608]{0}', space=vmem, size = 0x30000, scoped, tag = 'input window, operand 5, single buffered']
    %12 = vsyncpa [#allocation3], 0
    %13 = vsyncpa [#allocation5], 0
    // Predicated region
    $region2: #{_aux_head_call.1} parent=1 // pred_check
      _
    $region3: #{_aux_head_call.1} parent=1 // pred_check_branch
      %15 = sbr.rel (0) target = $region5
    $region4: #{_aux_head_call.1} parent=1 // pred_region
      _
    $region5: #{_aux_head_call.1} parent=1 // pred_fallthru
      _
    // Predicated region
    $region6: #{_aux_head_call.1} parent=1 // pred_check
      _
    $region7: #{_aux_head_call.1} parent=1 // pred_check_branch
      %17 = sbr.rel (0) target = $region9
    $region8: #{_aux_head_call.1} parent=1 // pred_region
      %s19 = ssub.s32 8192, 8192
      %20 = vsyncadd [#allocation3], %s19
      %s21 = sshll.u32 [#allocation2], 4
      %s22 = int_to_ptr.vmem [resolvable:$true] %s21
      %27 = dma.hbm_to_vmem [thread:$0]  %s1, 8192, %s22, [#allocation3], 256, 256, 16
    $region9: #{_aux_head_call.1} parent=1 // pred_fallthru
      _
    // Predicated region
    $region10: #{_aux_head_call.1} parent=1 // pred_check
      _
    $region11: #{_aux_head_call.1} parent=1 // pred_check_branch
      %29 = sbr.rel (0) target = $region13
    $region12: #{_aux_head_call.1} parent=1 // pred_region
      _
    $region13: #{_aux_head_call.1} parent=1 // pred_fallthru
      _
    // Predicated region
    $region14: #{_aux_head_call.1} parent=1 // pred_check
      _
    $region15: #{_aux_head_call.1} parent=1 // pred_check_branch
      %31 = sbr.rel (0) target = $region17
    $region16: #{_aux_head_call.1} parent=1 // pred_region
      %s33 = ssub.s32 24576, 24576
      %34 = vsyncadd [#allocation5], %s33
      %s35 = sshll.u32 [#allocation4], 4
      %s36 = int_to_ptr.vmem [resolvable:$true] %s35
      %41 = dma.hbm_to_vmem [thread:$0]  %s3, 24576, %s36, [#allocation5], 384, 384, 24
    $region17: #{_aux_head_call.1} parent=1 // pred_fallthru
      _
    // Predicated region
    $region18: #{_aux_head_call.1} parent=1 // pred_check
      _
    $region19: #{_aux_head_call.1} parent=1 // pred_check_branch
      %43 = sbr.rel (0) target = $region21
    $region20: #{_aux_head_call.1} parent=1 // pred_region
      _
    $region21: #{_aux_head_call.1} parent=1 // pred_fallthru
      _
    // Predicated region
    $region22: #{_aux_head_call.1} parent=1 // pred_check
      _
    $region23: #{_aux_head_call.1} parent=1 // pred_check_branch
      %45 = sbr.rel (0) target = $region25
    $region24: #{_aux_head_call.1} parent=1 // pred_region
      %s47 = ssub.s32 6144, 6144
      %48 = vsyncadd [#allocation5], %s47
      %s49 = sshll.u32 [#allocation6], 4
      %s50 = int_to_ptr.vmem [resolvable:$true] %s49
      %55 = dma.hbm_to_vmem [thread:$0]  %s5, 6144, %s50, [#allocation5], 64, 64, 4
    $region25: #{_aux_head_call.1} parent=1 // pred_fallthru
      _
    // Predicated region
    $region26: #{_aux_head_call.1} parent=1 // pred_check
      _
    $region27: #{_aux_head_call.1} parent=1 // pred_check_branch
      %57 = sbr.rel (0) target = $region29
    $region28: #{_aux_head_call.1} parent=1 // pred_region
      _
    $region29: #{_aux_head_call.1} parent=1 // pred_fallthru
      _
    // Predicated region
    $region30: #{_aux_head_call.1} parent=1 // pred_check
      _
    $region31: #{_aux_head_call.1} parent=1 // pred_check_branch
      %59 = sbr.rel (0) target = $region33
    $region32: #{_aux_head_call.1} parent=1 // pred_region
      %60 = dma.done [#allocation3], 8192
    $region33: #{_aux_head_call.1} parent=1 // pred_fallthru
      _
    // Predicated region
    $region34: #{_aux_head_call.1} parent=1 // pred_check
      _
    $region35: #{_aux_head_call.1} parent=1 // pred_check_branch
      %62 = sbr.rel (0) target = $region37
    $region36: #{_aux_head_call.1} parent=1 // pred_region
      %63 = dma.done [#allocation5], 24576
    $region37: #{_aux_head_call.1} parent=1 // pred_fallthru
      _
    // Predicated region
    $region38: #{_aux_head_call.1} parent=1 // pred_check
      _
    $region39: #{_aux_head_call.1} parent=1 // pred_check_branch
      %65 = sbr.rel (0) target = $region41
    $region40: #{_aux_head_call.1} parent=1 // pred_region
      %66 = dma.done [#allocation5], 6144
    $region41: #{_aux_head_call.1} parent=1 // pred_fallthru
      _
    %v68 = vld [vmem:[%s0] sm:$0xff]
    %v69 = vld [vmem:[%s0 + $0x8] sm:$0xff]
    %v70 = vld [vmem:[%s0 + $0x10] sm:$0xff]
    %v71 = vld [vmem:[%s0 + $0x18] sm:$0xff]
    %v72 = vmax.f32 %v68, 0.0
    %v73 = vmax.f32 %v69, 0.0
    %v74 = vmax.f32 %v70, 0.0
    %v75 = vmax.f32 %v71, 0.0
    %v76 = vpack.c.bf16 %v74, %v72
    %v77 = vpack.c.bf16 %v75, %v73
    %v78 = vld [vmem:[#allocation2] sm:$0xff]
    %v79 = vld [vmem:[#allocation2 + $0x8] sm:$0xff]
    %v80 = vld [vmem:[#allocation2 + $0x10] sm:$0xff]
    %v81 = vld [vmem:[#allocation2 + $0x18] sm:$0xff]
    %v82 = vld [vmem:[#allocation2 + $0x20] sm:$0xff]
    %v83 = vld [vmem:[#allocation2 + $0x28] sm:$0xff]
    %v84 = vld [vmem:[#allocation2 + $0x30] sm:$0xff]
    %v85 = vld [vmem:[#allocation2 + $0x38] sm:$0xff]
    %v86 = vld [vmem:[#allocation2 + $0x40] sm:$0xff]
    %v87 = vld [vmem:[#allocation2 + $0x48] sm:$0xff]
    %v88 = vld [vmem:[#allocation2 + $0x50] sm:$0xff]
    %v89 = vld [vmem:[#allocation2 + $0x58] sm:$0xff]
    %v90 = vld [vmem:[#allocation2 + $0x60] sm:$0xff]
    %v91 = vld [vmem:[#allocation2 + $0x68] sm:$0xff]
    %v92 = vld [vmem:[#allocation2 + $0x70] sm:$0xff]
    %v93 = vld [vmem:[#allocation2 + $0x78] sm:$0xff]
    %v94 = vld [vmem:[#allocation2 + $0x80] sm:$0xff]
    %v95 = vld [vmem:[#allocation2 + $0x88] sm:$0xff]
    %v96 = vld [vmem:[#allocation2 + $0x90] sm:$0xff]
    %v97 = vld [vmem:[#allocation2 + $0x98] sm:$0xff]
    %v98 = vld [vmem:[#allocation2 + $0xa0] sm:$0xff]
    %v99 = vld [vmem:[#allocation2 + $0xa8] sm:$0xff]
    %v100 = vld [vmem:[#allocation2 + $0xb0] sm:$0xff]
    %v101 = vld [vmem:[#allocation2 + $0xb8] sm:$0xff]
    %v102 = vld [vmem:[#allocation2 + $0xc0] sm:$0xff]
    %v103 = vld [vmem:[#allocation2 + $0xc8] sm:$0xff]
    %v104 = vld [vmem:[#allocation2 + $0xd0] sm:$0xff]
    %v105 = vld [vmem:[#allocation2 + $0xd8] sm:$0xff]
    %v106 = vld [vmem:[#allocation2 + $0xe0] sm:$0xff]
    %v107 = vld [vmem:[#allocation2 + $0xe8] sm:$0xff]
    %v108 = vld [vmem:[#allocation2 + $0xf0] sm:$0xff]
    %v109 = vld [vmem:[#allocation2 + $0xf8] sm:$0xff]
    %v110 = vld [vmem:[#allocation2 + $0x100] sm:$0xff]
    %v111 = vld [vmem:[#allocation2 + $0x108] sm:$0xff]
    %v112 = vld [vmem:[#allocation2 + $0x110] sm:$0xff]
    %v113 = vld [vmem:[#allocation2 + $0x118] sm:$0xff]
    %v114 = vld [vmem:[#allocation2 + $0x120] sm:$0xff]
    %v115 = vld [vmem:[#allocation2 + $0x128] sm:$0xff]
    %v116 = vld [vmem:[#allocation2 + $0x130] sm:$0xff]
    %v117 = vld [vmem:[#allocation2 + $0x138] sm:$0xff]
    %v118 = vld [vmem:[#allocation2 + $0x140] sm:$0xff]
    %v119 = vld [vmem:[#allocation2 + $0x148] sm:$0xff]
    %v120 = vld [vmem:[#allocation2 + $0x150] sm:$0xff]
    %v121 = vld [vmem:[#allocation2 + $0x158] sm:$0xff]
    %v122 = vld [vmem:[#allocation2 + $0x160] sm:$0xff]
    %v123 = vld [vmem:[#allocation2 + $0x168] sm:$0xff]
    %v124 = vld [vmem:[#allocation2 + $0x170] sm:$0xff]
    %v125 = vld [vmem:[#allocation2 + $0x178] sm:$0xff]
    %v126 = vld [vmem:[#allocation2 + $0x180] sm:$0xff]
    %v127 = vld [vmem:[#allocation2 + $0x188] sm:$0xff]
    %v128 = vld [vmem:[#allocation2 + $0x190] sm:$0xff]
    %v129 = vld [vmem:[#allocation2 + $0x198] sm:$0xff]
    %v130 = vld [vmem:[#allocation2 + $0x1a0] sm:$0xff]
    %v131 = vld [vmem:[#allocation2 + $0x1a8] sm:$0xff]
    %v132 = vld [vmem:[#allocation2 + $0x1b0] sm:$0xff]
    %v133 = vld [vmem:[#allocation2 + $0x1b8] sm:$0xff]
    %v134 = vld [vmem:[#allocation2 + $0x1c0] sm:$0xff]
    %v135 = vld [vmem:[#allocation2 + $0x1c8] sm:$0xff]
    %v136 = vld [vmem:[#allocation2 + $0x1d0] sm:$0xff]
    %v137 = vld [vmem:[#allocation2 + $0x1d8] sm:$0xff]
    %v138 = vld [vmem:[#allocation2 + $0x1e0] sm:$0xff]
    %v139 = vld [vmem:[#allocation2 + $0x1e8] sm:$0xff]
    %v140 = vld [vmem:[#allocation2 + $0x1f0] sm:$0xff]
    %v141 = vld [vmem:[#allocation2 + $0x1f8] sm:$0xff]
    %v142 = vld [vmem:[%s2] sm:$0xf]
    %v144 = vlaneseq
    %v145 = vshrl.u32 %v144, 7
    %v146 = vsub.s32 0, %v145
    %v147 = vrot.slane %v142, %v146
    %v148 = vlaneseq
    %v149 = vshrl.u32 %v148, 7
    %v150 = vsub.s32 1, %v149
    %v151 = vrot.slane %v142, %v150
    %v152 = vlaneseq
    %v153 = vshrl.u32 %v152, 7
    %v154 = vsub.s32 2, %v153
    %v155 = vrot.slane %v142, %v154
    %v156 = vlaneseq
    %v157 = vshrl.u32 %v156, 7
    %v158 = vsub.s32 3, %v157
    %v159 = vrot.slane %v142, %v158
    %v228 = vunpack.c.l.b16 %v78
    %v229 = vunpack.c.h.b16 %v78
    %v230 = vunpack.c.l.b16 %v79
    %v231 = vunpack.c.h.b16 %v79
    %v232 = vunpack.c.l.b16 %v80
    %v233 = vunpack.c.h.b16 %v80
    %v234 = vunpack.c.l.b16 %v81
    %v235 = vunpack.c.h.b16 %v81
    %v236 = vunpack.c.l.b16 %v82
    %v237 = vunpack.c.h.b16 %v82
    %v238 = vunpack.c.l.b16 %v83
    %v239 = vunpack.c.h.b16 %v83
    %v240 = vunpack.c.l.b16 %v84
    %v241 = vunpack.c.h.b16 %v84
    %v242 = vunpack.c.l.b16 %v85
    %v243 = vunpack.c.h.b16 %v85
    %v244 = vunpack.c.l.b16 %v86
    %v245 = vunpack.c.h.b16 %v86
    %v246 = vunpack.c.l.b16 %v87
    %v247 = vunpack.c.h.b16 %v87
    %v248 = vunpack.c.l.b16 %v88
    %v249 = vunpack.c.h.b16 %v88
    %v250 = vunpack.c.l.b16 %v89
    %v251 = vunpack.c.h.b16 %v89
    %v252 = vunpack.c.l.b16 %v90
    %v253 = vunpack.c.h.b16 %v90
    %v254 = vunpack.c.l.b16 %v91
    %v255 = vunpack.c.h.b16 %v91
    %v256 = vunpack.c.l.b16 %v92
    %v257 = vunpack.c.h.b16 %v92
    %v258 = vunpack.c.l.b16 %v93
    %v259 = vunpack.c.h.b16 %v93
    %v260 = vunpack.c.l.b16 %v94
    %v261 = vunpack.c.h.b16 %v94
    %v262 = vunpack.c.l.b16 %v95
    %v263 = vunpack.c.h.b16 %v95
    %v264 = vunpack.c.l.b16 %v96
    %v265 = vunpack.c.h.b16 %v96
    %v266 = vunpack.c.l.b16 %v97
    %v267 = vunpack.c.h.b16 %v97
    %v268 = vunpack.c.l.b16 %v98
    %v269 = vunpack.c.h.b16 %v98
    %v270 = vunpack.c.l.b16 %v99
    %v271 = vunpack.c.h.b16 %v99
    %v272 = vunpack.c.l.b16 %v100
    %v273 = vunpack.c.h.b16 %v100
    %v274 = vunpack.c.l.b16 %v101
    %v275 = vunpack.c.h.b16 %v101
    %v276 = vunpack.c.l.b16 %v102
    %v277 = vunpack.c.h.b16 %v102
    %v278 = vunpack.c.l.b16 %v103
    %v279 = vunpack.c.h.b16 %v103
    %v280 = vunpack.c.l.b16 %v104
    %v281 = vunpack.c.h.b16 %v104
    %v282 = vunpack.c.l.b16 %v105
    %v283 = vunpack.c.h.b16 %v105
    %v284 = vunpack.c.l.b16 %v106
    %v285 = vunpack.c.h.b16 %v106
    %v286 = vunpack.c.l.b16 %v107
    %v287 = vunpack.c.h.b16 %v107
    %v288 = vunpack.c.l.b16 %v108
    %v289 = vunpack.c.h.b16 %v108
    %v290 = vunpack.c.l.b16 %v109
    %v291 = vunpack.c.h.b16 %v109
    %v292 = vunpack.c.l.b16 %v110
    %v293 = vunpack.c.h.b16 %v110
    %v294 = vunpack.c.l.b16 %v111
    %v295 = vunpack.c.h.b16 %v111
    %v296 = vunpack.c.l.b16 %v112
    %v297 = vunpack.c.h.b16 %v112
    %v298 = vunpack.c.l.b16 %v113
    %v299 = vunpack.c.h.b16 %v113
    %v300 = vunpack.c.l.b16 %v114
    %v301 = vunpack.c.h.b16 %v114
    %v302 = vunpack.c.l.b16 %v115
    %v303 = vunpack.c.h.b16 %v115
    %v304 = vunpack.c.l.b16 %v116
    %v305 = vunpack.c.h.b16 %v116
    %v306 = vunpack.c.l.b16 %v117
    %v307 = vunpack.c.h.b16 %v117
    %v308 = vunpack.c.l.b16 %v118
    %v309 = vunpack.c.h.b16 %v118
    %v310 = vunpack.c.l.b16 %v119
    %v311 = vunpack.c.h.b16 %v119
    %v312 = vunpack.c.l.b16 %v120
    %v313 = vunpack.c.h.b16 %v120
    %v314 = vunpack.c.l.b16 %v121
    %v315 = vunpack.c.h.b16 %v121
    %v316 = vunpack.c.l.b16 %v122
    %v317 = vunpack.c.h.b16 %v122
    %v318 = vunpack.c.l.b16 %v123
    %v319 = vunpack.c.h.b16 %v123
    %v320 = vunpack.c.l.b16 %v124
    %v321 = vunpack.c.h.b16 %v124
    %v322 = vunpack.c.l.b16 %v125
    %v323 = vunpack.c.h.b16 %v125
    %v324 = vunpack.c.l.b16 %v126
    %v325 = vunpack.c.h.b16 %v126
    %v326 = vunpack.c.l.b16 %v127
    %v327 = vunpack.c.h.b16 %v127
    %v328 = vunpack.c.l.b16 %v128
    %v329 = vunpack.c.h.b16 %v128
    %v330 = vunpack.c.l.b16 %v129
    %v331 = vunpack.c.h.b16 %v129
    %v332 = vunpack.c.l.b16 %v130
    %v333 = vunpack.c.h.b16 %v130
    %v334 = vunpack.c.l.b16 %v131
    %v335 = vunpack.c.h.b16 %v131
    %v336 = vunpack.c.l.b16 %v132
    %v337 = vunpack.c.h.b16 %v132
    %v338 = vunpack.c.l.b16 %v133
    %v339 = vunpack.c.h.b16 %v133
    %v340 = vunpack.c.l.b16 %v134
    %v341 = vunpack.c.h.b16 %v134
    %v342 = vunpack.c.l.b16 %v135
    %v343 = vunpack.c.h.b16 %v135
    %v344 = vunpack.c.l.b16 %v136
    %v345 = vunpack.c.h.b16 %v136
    %v346 = vunpack.c.l.b16 %v137
    %v347 = vunpack.c.h.b16 %v137
    %v348 = vunpack.c.l.b16 %v138
    %v349 = vunpack.c.h.b16 %v138
    %v350 = vunpack.c.l.b16 %v139
    %v351 = vunpack.c.h.b16 %v139
    %v352 = vunpack.c.l.b16 %v140
    %v353 = vunpack.c.h.b16 %v140
    %v354 = vunpack.c.l.b16 %v141
    %v355 = vunpack.c.h.b16 %v141
    %v356 = vpack.c.b16 %v232, %v228
    %v357 = vpack.c.b16 %v233, %v229
    %v358 = vpack.c.b16 %v234, %v230
    %v359 = vpack.c.b16 %v235, %v231
    %v360 = vpack.c.b16 %v240, %v236
    %v361 = vpack.c.b16 %v241, %v237
    %v362 = vpack.c.b16 %v242, %v238
    %v363 = vpack.c.b16 %v243, %v239
    %v364 = vpack.c.b16 %v248, %v244
    %v365 = vpack.c.b16 %v249, %v245
    %v366 = vpack.c.b16 %v250, %v246
    %v367 = vpack.c.b16 %v251, %v247
    %v368 = vpack.c.b16 %v256, %v252
    %v369 = vpack.c.b16 %v257, %v253
    %v370 = vpack.c.b16 %v258, %v254
    %v371 = vpack.c.b16 %v259, %v255
    %v372 = vpack.c.b16 %v264, %v260
    %v373 = vpack.c.b16 %v265, %v261
    %v374 = vpack.c.b16 %v266, %v262
    %v375 = vpack.c.b16 %v267, %v263
    %v376 = vpack.c.b16 %v272, %v268
    %v377 = vpack.c.b16 %v273, %v269
    %v378 = vpack.c.b16 %v274, %v270
    %v379 = vpack.c.b16 %v275, %v271
    %v380 = vpack.c.b16 %v280, %v276
    %v381 = vpack.c.b16 %v281, %v277
    %v382 = vpack.c.b16 %v282, %v278
    %v383 = vpack.c.b16 %v283, %v279
    %v384 = vpack.c.b16 %v288, %v284
    %v385 = vpack.c.b16 %v289, %v285
    %v386 = vpack.c.b16 %v290, %v286
    %v387 = vpack.c.b16 %v291, %v287
    %v388 = vpack.c.b16 %v296, %v292
    %v389 = vpack.c.b16 %v297, %v293
    %v390 = vpack.c.b16 %v298, %v294
    %v391 = vpack.c.b16 %v299, %v295
    %v392 = vpack.c.b16 %v304, %v300
    %v393 = vpack.c.b16 %v305, %v301
    %v394 = vpack.c.b16 %v306, %v302
    %v395 = vpack.c.b16 %v307, %v303
    %v396 = vpack.c.b16 %v312, %v308
    %v397 = vpack.c.b16 %v313, %v309
    %v398 = vpack.c.b16 %v314, %v310
    %v399 = vpack.c.b16 %v315, %v311
    %v400 = vpack.c.b16 %v320, %v316
    %v401 = vpack.c.b16 %v321, %v317
    %v402 = vpack.c.b16 %v322, %v318
    %v403 = vpack.c.b16 %v323, %v319
    %v404 = vpack.c.b16 %v328, %v324
    %v405 = vpack.c.b16 %v329, %v325
    %v406 = vpack.c.b16 %v330, %v326
    %v407 = vpack.c.b16 %v331, %v327
    %v408 = vpack.c.b16 %v336, %v332
    %v409 = vpack.c.b16 %v337, %v333
    %v410 = vpack.c.b16 %v338, %v334
    %v411 = vpack.c.b16 %v339, %v335
    %v412 = vpack.c.b16 %v344, %v340
    %v413 = vpack.c.b16 %v345, %v341
    %v414 = vpack.c.b16 %v346, %v342
    %v415 = vpack.c.b16 %v347, %v343
    %v416 = vpack.c.b16 %v352, %v348
    %v417 = vpack.c.b16 %v353, %v349
    %v418 = vpack.c.b16 %v354, %v350
    %v419 = vpack.c.b16 %v355, %v351
    %484 = vmatprep.subr.bf16.mxu0 %v385
    %485 = vmatpush1.bf16.msra.mxu0 %v384
    %486 = vmatprep.subr.bf16.mxu0 %v381
    %487 = vmatpush1.bf16.msra.mxu0 %v380
    %488 = vmatprep.subr.bf16.mxu0 %v377
    %489 = vmatpush1.bf16.msra.mxu0 %v376
    %490 = vmatprep.subr.bf16.mxu0 %v373
    %491 = vmatpush1.bf16.msra.mxu0 %v372
    %492 = vmatprep.subr.bf16.mxu0 %v369
    %493 = vmatpush1.bf16.msra.mxu0 %v368
    %494 = vmatprep.subr.bf16.mxu0 %v365
    %495 = vmatpush1.bf16.msra.mxu0 %v364
    %496 = vmatprep.subr.bf16.mxu0 %v361
    %497 = vmatpush1.bf16.msra.mxu0 %v360
    %498 = vmatprep.subr.bf16.mxu0 %v357
    %499 = vmatpush1.bf16.msra.mxu0 %v356
    %500 = vmatprep.subr.bf16.mxu0 %v417
    %501 = vmatpush2.bf16.msra.mxu0 %v416
    %502 = vmatprep.subr.bf16.mxu0 %v413
    %503 = vmatpush2.bf16.msra.mxu0 %v412
    %504 = vmatprep.subr.bf16.mxu0 %v409
    %505 = vmatpush2.bf16.msra.mxu0 %v408
    %506 = vmatprep.subr.bf16.mxu0 %v405
    %507 = vmatpush2.bf16.msra.mxu0 %v404
    %508 = vmatprep.subr.bf16.mxu0 %v401
    %509 = vmatpush2.bf16.msra.mxu0 %v400
    %510 = vmatprep.subr.bf16.mxu0 %v397
    %511 = vmatpush2.bf16.msra.mxu0 %v396
    %512 = vmatprep.subr.bf16.mxu0 %v393
    %513 = vmatpush2.bf16.msra.mxu0 %v392
    %514 = vmatprep.subr.bf16.mxu0 %v389
    %515 = vmatpush2.bf16.msra.mxu0 %v388
    %516 = vmatprep.mubr.bf16.mxu0 %v77
    %517 = vmatmul.mubr.bf16.gmra.mxu0 %v76
    %v518 = vpop.f32.mrf.mxu0
    %v519 = vadd.f32 %v147, %v518
    %v520 = vpop.f32.mrf.mxu0
    %v521 = vadd.f32 %v151, %v520
    %v522 = vpop.f32.mrf.mxu0
    %v523 = vadd.f32 %v147, %v522
    %v524 = vpop.f32.mrf.mxu0
    %v525 = vadd.f32 %v151, %v524
    %526 = vdwg.mxu0
    %527 = vmatprep.subr.bf16.mxu0 %v387
    %528 = vmatpush1.bf16.msra.mxu0 %v386
    %529 = vmatprep.subr.bf16.mxu0 %v383
    %530 = vmatpush1.bf16.msra.mxu0 %v382
    %531 = vmatprep.subr.bf16.mxu0 %v379
    %532 = vmatpush1.bf16.msra.mxu0 %v378
    %533 = vmatprep.subr.bf16.mxu0 %v375
    %534 = vmatpush1.bf16.msra.mxu0 %v374
    %535 = vmatprep.subr.bf16.mxu0 %v371
    %536 = vmatpush1.bf16.msra.mxu0 %v370
    %537 = vmatprep.subr.bf16.mxu0 %v367
    %538 = vmatpush1.bf16.msra.mxu0 %v366
    %539 = vmatprep.subr.bf16.mxu0 %v363
    %540 = vmatpush1.bf16.msra.mxu0 %v362
    %541 = vmatprep.subr.bf16.mxu0 %v359
    %542 = vmatpush1.bf16.msra.mxu0 %v358
    %543 = vmatprep.subr.bf16.mxu0 %v419
    %544 = vmatpush2.bf16.msra.mxu0 %v418
    %545 = vmatprep.subr.bf16.mxu0 %v415
    %546 = vmatpush2.bf16.msra.mxu0 %v414
    %547 = vmatprep.subr.bf16.mxu0 %v411
    %548 = vmatpush2.bf16.msra.mxu0 %v410
    %549 = vmatprep.subr.bf16.mxu0 %v407
    %550 = vmatpush2.bf16.msra.mxu0 %v406
    %551 = vmatprep.subr.bf16.mxu0 %v403
    %552 = vmatpush2.bf16.msra.mxu0 %v402
    %553 = vmatprep.subr.bf16.mxu0 %v399
    %554 = vmatpush2.bf16.msra.mxu0 %v398
    %555 = vmatprep.subr.bf16.mxu0 %v395
    %556 = vmatpush2.bf16.msra.mxu0 %v394
    %557 = vmatprep.subr.bf16.mxu0 %v391
    %558 = vmatpush2.bf16.msra.mxu0 %v390
    %559 = vmatprep.mubr.bf16.mxu0 %v77
    %560 = vmatmul.mubr.bf16.gmra.mxu0 %v76
    %v561 = vpop.f32.mrf.mxu0
    %v562 = vadd.f32 %v155, %v561
    %v563 = vpop.f32.mrf.mxu0
    %v564 = vadd.f32 %v159, %v563
    %v565 = vpop.f32.mrf.mxu0
    %v566 = vadd.f32 %v155, %v565
    %v567 = vpop.f32.mrf.mxu0
    %v568 = vadd.f32 %v159, %v567
    %569 = vdwg.mxu0
    %v570 = vmax.f32 %v519, 0.0
    %v571 = vmax.f32 %v521, 0.0
    %v572 = vmax.f32 %v562, 0.0
    %v573 = vmax.f32 %v564, 0.0
    %v574 = vmax.f32 %v523, 0.0
    %v575 = vmax.f32 %v525, 0.0
    %v576 = vmax.f32 %v566, 0.0
    %v577 = vmax.f32 %v568, 0.0
    %v578 = vpack.c.bf16 %v574, %v570
    %v579 = vpack.c.bf16 %v575, %v571
    %v580 = vpack.c.bf16 %v576, %v572
    %v581 = vpack.c.bf16 %v577, %v573
    %v582 = vld [vmem:[#allocation4] sm:$0xff]
    %v583 = vld [vmem:[#allocation4 + $0x8] sm:$0xff]
    %v584 = vld [vmem:[#allocation4 + $0x10] sm:$0xff]
    %v585 = vld [vmem:[#allocation4 + $0x18] sm:$0xff]
    %v586 = vld [vmem:[#allocation4 + $0x20] sm:$0xff]
    %v587 = vld [vmem:[#allocation4 + $0x28] sm:$0xff]
    %v588 = vld [vmem:[#allocation4 + $0x30] sm:$0xff]
    %v589 = vld [vmem:[#allocation4 + $0x38] sm:$0xff]
    %v590 = vld [vmem:[#allocation4 + $0x40] sm:$0xff]
    %v591 = vld [vmem:[#allocation4 + $0x48] sm:$0xff]
    %v592 = vld [vmem:[#allocation4 + $0x50] sm:$0xff]
    %v593 = vld [vmem:[#allocation4 + $0x58] sm:$0xff]
    %v594 = vld [vmem:[#allocation4 + $0x60] sm:$0xff]
    %v595 = vld [vmem:[#allocation4 + $0x68] sm:$0xff]
    %v596 = vld [vmem:[#allocation4 + $0x70] sm:$0xff]
    %v597 = vld [vmem:[#allocation4 + $0x78] sm:$0xff]
    %v598 = vld [vmem:[#allocation4 + $0x80] sm:$0xff]
    %v599 = vld [vmem:[#allocation4 + $0x88] sm:$0xff]
    %v600 = vld [vmem:[#allocation4 + $0x90] sm:$0xff]
    %v601 = vld [vmem:[#allocation4 + $0x98] sm:$0xff]
    %v602 = vld [vmem:[#allocation4 + $0xa0] sm:$0xff]
    %v603 = vld [vmem:[#allocation4 + $0xa8] sm:$0xff]
    %v604 = vld [vmem:[#allocation4 + $0xb0] sm:$0xff]
    %v605 = vld [vmem:[#allocation4 + $0xb8] sm:$0xff]
    %v606 = vld [vmem:[#allocation4 + $0xc0] sm:$0xff]
    %v607 = vld [vmem:[#allocation4 + $0xc8] sm:$0xff]
    %v608 = vld [vmem:[#allocation4 + $0xd0] sm:$0xff]
    %v609 = vld [vmem:[#allocation4 + $0xd8] sm:$0xff]
    %v610 = vld [vmem:[#allocation4 + $0xe0] sm:$0xff]
    %v611 = vld [vmem:[#allocation4 + $0xe8] sm:$0xff]
    %v612 = vld [vmem:[#allocation4 + $0xf0] sm:$0xff]
    %v613 = vld [vmem:[#allocation4 + $0xf8] sm:$0xff]
    %v614 = vld [vmem:[#allocation4 + $0x100] sm:$0xff]
    %v615 = vld [vmem:[#allocation4 + $0x108] sm:$0xff]
    %v616 = vld [vmem:[#allocation4 + $0x110] sm:$0xff]
    %v617 = vld [vmem:[#allocation4 + $0x118] sm:$0xff]
    %v618 = vld [vmem:[#allocation4 + $0x120] sm:$0xff]
    %v619 = vld [vmem:[#allocation4 + $0x128] sm:$0xff]
    %v620 = vld [vmem:[#allocation4 + $0x130] sm:$0xff]
    %v621 = vld [vmem:[#allocation4 + $0x138] sm:$0xff]
    %v622 = vld [vmem:[#allocation4 + $0x140] sm:$0xff]
    %v623 = vld [vmem:[#allocation4 + $0x148] sm:$0xff]
    %v624 = vld [vmem:[#allocation4 + $0x150] sm:$0xff]
    %v625 = vld [vmem:[#allocation4 + $0x158] sm:$0xff]
    %v626 = vld [vmem:[#allocation4 + $0x160] sm:$0xff]
    %v627 = vld [vmem:[#allocation4 + $0x168] sm:$0xff]
    %v628 = vld [vmem:[#allocation4 + $0x170] sm:$0xff]
    %v629 = vld [vmem:[#allocation4 + $0x178] sm:$0xff]
    %v630 = vld [vmem:[#allocation4 + $0x180] sm:$0xff]
    %v631 = vld [vmem:[#allocation4 + $0x188] sm:$0xff]
    %v632 = vld [vmem:[#allocation4 + $0x190] sm:$0xff]
    %v633 = vld [vmem:[#allocation4 + $0x198] sm:$0xff]
    %v634 = vld [vmem:[#allocation4 + $0x1a0] sm:$0xff]
    %v635 = vld [vmem:[#allocation4 + $0x1a8] sm:$0xff]
    %v636 = vld [vmem:[#allocation4 + $0x1b0] sm:$0xff]
    %v637 = vld [vmem:[#allocation4 + $0x1b8] sm:$0xff]
    %v638 = vld [vmem:[#allocation4 + $0x1c0] sm:$0xff]
    %v639 = vld [vmem:[#allocation4 + $0x1c8] sm:$0xff]
    %v640 = vld [vmem:[#allocation4 + $0x1d0] sm:$0xff]
    %v641 = vld [vmem:[#allocation4 + $0x1d8] sm:$0xff]
    %v642 = vld [vmem:[#allocation4 + $0x1e0] sm:$0xff]
    %v643 = vld [vmem:[#allocation4 + $0x1e8] sm:$0xff]
    %v644 = vld [vmem:[#allocation4 + $0x1f0] sm:$0xff]
    %v645 = vld [vmem:[#allocation4 + $0x1f8] sm:$0xff]
    %v646 = vld [vmem:[#allocation4 + $0x200] sm:$0xff]
    %v647 = vld [vmem:[#allocation4 + $0x208] sm:$0xff]
    %v648 = vld [vmem:[#allocation4 + $0x210] sm:$0xff]
    %v649 = vld [vmem:[#allocation4 + $0x218] sm:$0xff]
    %v650 = vld [vmem:[#allocation4 + $0x220] sm:$0xff]
    %v651 = vld [vmem:[#allocation4 + $0x228] sm:$0xff]
    %v652 = vld [vmem:[#allocation4 + $0x230] sm:$0xff]
    %v653 = vld [vmem:[#allocation4 + $0x238] sm:$0xff]
    %v654 = vld [vmem:[#allocation4 + $0x240] sm:$0xff]
    %v655 = vld [vmem:[#allocation4 + $0x248] sm:$0xff]
    %v656 = vld [vmem:[#allocation4 + $0x250] sm:$0xff]
    %v657 = vld [vmem:[#allocation4 + $0x258] sm:$0xff]
    %v658 = vld [vmem:[#allocation4 + $0x260] sm:$0xff]
    %v659 = vld [vmem:[#allocation4 + $0x268] sm:$0xff]
    %v660 = vld [vmem:[#allocation4 + $0x270] sm:$0xff]
    %v661 = vld [vmem:[#allocation4 + $0x278] sm:$0xff]
    %v662 = vld [vmem:[#allocation4 + $0x280] sm:$0xff]
    %v663 = vld [vmem:[#allocation4 + $0x288] sm:$0xff]
    %v664 = vld [vmem:[#allocation4 + $0x290] sm:$0xff]
    %v665 = vld [vmem:[#allocation4 + $0x298] sm:$0xff]
    %v666 = vld [vmem:[#allocation4 + $0x2a0] sm:$0xff]
    %v667 = vld [vmem:[#allocation4 + $0x2a8] sm:$0xff]
    %v668 = vld [vmem:[#allocation4 + $0x2b0] sm:$0xff]
    %v669 = vld [vmem:[#allocation4 + $0x2b8] sm:$0xff]
    %v670 = vld [vmem:[#allocation4 + $0x2c0] sm:$0xff]
    %v671 = vld [vmem:[#allocation4 + $0x2c8] sm:$0xff]
    %v672 = vld [vmem:[#allocation4 + $0x2d0] sm:$0xff]
    %v673 = vld [vmem:[#allocation4 + $0x2d8] sm:$0xff]
    %v674 = vld [vmem:[#allocation4 + $0x2e0] sm:$0xff]
    %v675 = vld [vmem:[#allocation4 + $0x2e8] sm:$0xff]
    %v676 = vld [vmem:[#allocation4 + $0x2f0] sm:$0xff]
    %v677 = vld [vmem:[#allocation4 + $0x2f8] sm:$0xff]
    %v678 = vld [vmem:[#allocation4 + $0x300] sm:$0xff]
    %v679 = vld [vmem:[#allocation4 + $0x308] sm:$0xff]
    %v680 = vld [vmem:[#allocation4 + $0x310] sm:$0xff]
    %v681 = vld [vmem:[#allocation4 + $0x318] sm:$0xff]
    %v682 = vld [vmem:[#allocation4 + $0x320] sm:$0xff]
    %v683 = vld [vmem:[#allocation4 + $0x328] sm:$0xff]
    %v684 = vld [vmem:[#allocation4 + $0x330] sm:$0xff]
    %v685 = vld [vmem:[#allocation4 + $0x338] sm:$0xff]
    %v686 = vld [vmem:[#allocation4 + $0x340] sm:$0xff]
    %v687 = vld [vmem:[#allocation4 + $0x348] sm:$0xff]
    %v688 = vld [vmem:[#allocation4 + $0x350] sm:$0xff]
    %v689 = vld [vmem:[#allocation4 + $0x358] sm:$0xff]
    %v690 = vld [vmem:[#allocation4 + $0x360] sm:$0xff]
    %v691 = vld [vmem:[#allocation4 + $0x368] sm:$0xff]
    %v692 = vld [vmem:[#allocation4 + $0x370] sm:$0xff]
    %v693 = vld [vmem:[#allocation4 + $0x378] sm:$0xff]
    %v694 = vld [vmem:[#allocation4 + $0x380] sm:$0xff]
    %v695 = vld [vmem:[#allocation4 + $0x388] sm:$0xff]
    %v696 = vld [vmem:[#allocation4 + $0x390] sm:$0xff]
    %v697 = vld [vmem:[#allocation4 + $0x398] sm:$0xff]
    %v698 = vld [vmem:[#allocation4 + $0x3a0] sm:$0xff]
    %v699 = vld [vmem:[#allocation4 + $0x3a8] sm:$0xff]
    %v700 = vld [vmem:[#allocation4 + $0x3b0] sm:$0xff]
    %v701 = vld [vmem:[#allocation4 + $0x3b8] sm:$0xff]
    %v702 = vld [vmem:[#allocation4 + $0x3c0] sm:$0xff]
    %v703 = vld [vmem:[#allocation4 + $0x3c8] sm:$0xff]
    %v704 = vld [vmem:[#allocation4 + $0x3d0] sm:$0xff]
    %v705 = vld [vmem:[#allocation4 + $0x3d8] sm:$0xff]
    %v706 = vld [vmem:[#allocation4 + $0x3e0] sm:$0xff]
    %v707 = vld [vmem:[#allocation4 + $0x3e8] sm:$0xff]
    %v708 = vld [vmem:[#allocation4 + $0x3f0] sm:$0xff]
    %v709 = vld [vmem:[#allocation4 + $0x3f8] sm:$0xff]
    %v710 = vld [vmem:[#allocation4 + $0x400] sm:$0xff]
    %v711 = vld [vmem:[#allocation4 + $0x408] sm:$0xff]
    %v712 = vld [vmem:[#allocation4 + $0x410] sm:$0xff]
    %v713 = vld [vmem:[#allocation4 + $0x418] sm:$0xff]
    %v714 = vld [vmem:[#allocation4 + $0x420] sm:$0xff]
    %v715 = vld [vmem:[#allocation4 + $0x428] sm:$0xff]
    %v716 = vld [vmem:[#allocation4 + $0x430] sm:$0xff]
    %v717 = vld [vmem:[#allocation4 + $0x438] sm:$0xff]
    %v718 = vld [vmem:[#allocation4 + $0x440] sm:$0xff]
    %v719 = vld [vmem:[#allocation4 + $0x448] sm:$0xff]
    %v720 = vld [vmem:[#allocation4 + $0x450] sm:$0xff]
    %v721 = vld [vmem:[#allocation4 + $0x458] sm:$0xff]
    %v722 = vld [vmem:[#allocation4 + $0x460] sm:$0xff]
    %v723 = vld [vmem:[#allocation4 + $0x468] sm:$0xff]
    %v724 = vld [vmem:[#allocation4 + $0x470] sm:$0xff]
    %v725 = vld [vmem:[#allocation4 + $0x478] sm:$0xff]
    %v726 = vld [vmem:[#allocation4 + $0x480] sm:$0xff]
    %v727 = vld [vmem:[#allocation4 + $0x488] sm:$0xff]
    %v728 = vld [vmem:[#allocation4 + $0x490] sm:$0xff]
    %v729 = vld [vmem:[#allocation4 + $0x498] sm:$0xff]
    %v730 = vld [vmem:[#allocation4 + $0x4a0] sm:$0xff]
    %v731 = vld [vmem:[#allocation4 + $0x4a8] sm:$0xff]
    %v732 = vld [vmem:[#allocation4 + $0x4b0] sm:$0xff]
    %v733 = vld [vmem:[#allocation4 + $0x4b8] sm:$0xff]
    %v734 = vld [vmem:[#allocation4 + $0x4c0] sm:$0xff]
    %v735 = vld [vmem:[#allocation4 + $0x4c8] sm:$0xff]
    %v736 = vld [vmem:[#allocation4 + $0x4d0] sm:$0xff]
    %v737 = vld [vmem:[#allocation4 + $0x4d8] sm:$0xff]
    %v738 = vld [vmem:[#allocation4 + $0x4e0] sm:$0xff]
    %v739 = vld [vmem:[#allocation4 + $0x4e8] sm:$0xff]
    %v740 = vld [vmem:[#allocation4 + $0x4f0] sm:$0xff]
    %v741 = vld [vmem:[#allocation4 + $0x4f8] sm:$0xff]
    %v742 = vld [vmem:[#allocation4 + $0x500] sm:$0xff]
    %v743 = vld [vmem:[#allocation4 + $0x508] sm:$0xff]
    %v744 = vld [vmem:[#allocation4 + $0x510] sm:$0xff]
    %v745 = vld [vmem:[#allocation4 + $0x518] sm:$0xff]
    %v746 = vld [vmem:[#allocation4 + $0x520] sm:$0xff]
    %v747 = vld [vmem:[#allocation4 + $0x528] sm:$0xff]
    %v748 = vld [vmem:[#allocation4 + $0x530] sm:$0xff]
    %v749 = vld [vmem:[#allocation4 + $0x538] sm:$0xff]
    %v750 = vld [vmem:[#allocation4 + $0x540] sm:$0xff]
    %v751 = vld [vmem:[#allocation4 + $0x548] sm:$0xff]
    %v752 = vld [vmem:[#allocation4 + $0x550] sm:$0xff]
    %v753 = vld [vmem:[#allocation4 + $0x558] sm:$0xff]
    %v754 = vld [vmem:[#allocation4 + $0x560] sm:$0xff]
    %v755 = vld [vmem:[#allocation4 + $0x568] sm:$0xff]
    %v756 = vld [vmem:[#allocation4 + $0x570] sm:$0xff]
    %v757 = vld [vmem:[#allocation4 + $0x578] sm:$0xff]
    %v758 = vld [vmem:[#allocation4 + $0x580] sm:$0xff]
    %v759 = vld [vmem:[#allocation4 + $0x588] sm:$0xff]
    %v760 = vld [vmem:[#allocation4 + $0x590] sm:$0xff]
    %v761 = vld [vmem:[#allocation4 + $0x598] sm:$0xff]
    %v762 = vld [vmem:[#allocation4 + $0x5a0] sm:$0xff]
    %v763 = vld [vmem:[#allocation4 + $0x5a8] sm:$0xff]
    %v764 = vld [vmem:[#allocation4 + $0x5b0] sm:$0xff]
    %v765 = vld [vmem:[#allocation4 + $0x5b8] sm:$0xff]
    %v766 = vld [vmem:[#allocation4 + $0x5c0] sm:$0xff]
    %v767 = vld [vmem:[#allocation4 + $0x5c8] sm:$0xff]
    %v768 = vld [vmem:[#allocation4 + $0x5d0] sm:$0xff]
    %v769 = vld [vmem:[#allocation4 + $0x5d8] sm:$0xff]
    %v770 = vld [vmem:[#allocation4 + $0x5e0] sm:$0xff]
    %v771 = vld [vmem:[#allocation4 + $0x5e8] sm:$0xff]
    %v772 = vld [vmem:[#allocation4 + $0x5f0] sm:$0xff]
    %v773 = vld [vmem:[#allocation4 + $0x5f8] sm:$0xff]
    %v774 = vld [vmem:[%s4] sm:$0x3f]
    %v776 = vlaneseq
    %v777 = vshrl.u32 %v776, 7
    %v778 = vsub.s32 0, %v777
    %v779 = vrot.slane %v774, %v778
    %v780 = vlaneseq
    %v781 = vshrl.u32 %v780, 7
    %v782 = vsub.s32 1, %v781
    %v783 = vrot.slane %v774, %v782
    %v784 = vlaneseq
    %v785 = vshrl.u32 %v784, 7
    %v786 = vsub.s32 2, %v785
    %v787 = vrot.slane %v774, %v786
    %v788 = vlaneseq
    %v789 = vshrl.u32 %v788, 7
    %v790 = vsub.s32 3, %v789
    %v791 = vrot.slane %v774, %v790
    %v792 = vlaneseq
    %v793 = vshrl.u32 %v792, 7
    %v794 = vsub.s32 4, %v793
    %v795 = vrot.slane %v774, %v794
    %v796 = vlaneseq
    %v797 = vshrl.u32 %v796, 7
    %v798 = vsub.s32 5, %v797
    %v799 = vrot.slane %v774, %v798
    %v998 = vunpack.c.l.b16 %v582
    %v999 = vunpack.c.h.b16 %v582
    %v1000 = vunpack.c.l.b16 %v583
    %v1001 = vunpack.c.h.b16 %v583
    %v1002 = vunpack.c.l.b16 %v584
    %v1003 = vunpack.c.h.b16 %v584
    %v1004 = vunpack.c.l.b16 %v585
    %v1005 = vunpack.c.h.b16 %v585
    %v1006 = vunpack.c.l.b16 %v586
    %v1007 = vunpack.c.h.b16 %v586
    %v1008 = vunpack.c.l.b16 %v587
    %v1009 = vunpack.c.h.b16 %v587
    %v1010 = vunpack.c.l.b16 %v588
    %v1011 = vunpack.c.h.b16 %v588
    %v1012 = vunpack.c.l.b16 %v589
    %v1013 = vunpack.c.h.b16 %v589
    %v1014 = vunpack.c.l.b16 %v590
    %v1015 = vunpack.c.h.b16 %v590
    %v1016 = vunpack.c.l.b16 %v591
    %v1017 = vunpack.c.h.b16 %v591
    %v1018 = vunpack.c.l.b16 %v592
    %v1019 = vunpack.c.h.b16 %v592
    %v1020 = vunpack.c.l.b16 %v593
    %v1021 = vunpack.c.h.b16 %v593
    %v1022 = vunpack.c.l.b16 %v594
    %v1023 = vunpack.c.h.b16 %v594
    %v1024 = vunpack.c.l.b16 %v595
    %v1025 = vunpack.c.h.b16 %v595
    %v1026 = vunpack.c.l.b16 %v596
    %v1027 = vunpack.c.h.b16 %v596
    %v1028 = vunpack.c.l.b16 %v597
    %v1029 = vunpack.c.h.b16 %v597
    %v1030 = vunpack.c.l.b16 %v598
    %v1031 = vunpack.c.h.b16 %v598
    %v1032 = vunpack.c.l.b16 %v599
    %v1033 = vunpack.c.h.b16 %v599
    %v1034 = vunpack.c.l.b16 %v600
    %v1035 = vunpack.c.h.b16 %v600
    %v1036 = vunpack.c.l.b16 %v601
    %v1037 = vunpack.c.h.b16 %v601
    %v1038 = vunpack.c.l.b16 %v602
    %v1039 = vunpack.c.h.b16 %v602
    %v1040 = vunpack.c.l.b16 %v603
    %v1041 = vunpack.c.h.b16 %v603
    %v1042 = vunpack.c.l.b16 %v604
    %v1043 = vunpack.c.h.b16 %v604
    %v1044 = vunpack.c.l.b16 %v605
    %v1045 = vunpack.c.h.b16 %v605
    %v1046 = vunpack.c.l.b16 %v606
    %v1047 = vunpack.c.h.b16 %v606
    %v1048 = vunpack.c.l.b16 %v607
    %v1049 = vunpack.c.h.b16 %v607
    %v1050 = vunpack.c.l.b16 %v608
    %v1051 = vunpack.c.h.b16 %v608
    %v1052 = vunpack.c.l.b16 %v609
    %v1053 = vunpack.c.h.b16 %v609
    %v1054 = vunpack.c.l.b16 %v610
    %v1055 = vunpack.c.h.b16 %v610
    %v1056 = vunpack.c.l.b16 %v611
    %v1057 = vunpack.c.h.b16 %v611
    %v1058 = vunpack.c.l.b16 %v612
    %v1059 = vunpack.c.h.b16 %v612
    %v1060 = vunpack.c.l.b16 %v613
    %v1061 = vunpack.c.h.b16 %v613
    %v1062 = vunpack.c.l.b16 %v614
    %v1063 = vunpack.c.h.b16 %v614
    %v1064 = vunpack.c.l.b16 %v615
    %v1065 = vunpack.c.h.b16 %v615
    %v1066 = vunpack.c.l.b16 %v616
    %v1067 = vunpack.c.h.b16 %v616
    %v1068 = vunpack.c.l.b16 %v617
    %v1069 = vunpack.c.h.b16 %v617
    %v1070 = vunpack.c.l.b16 %v618
    %v1071 = vunpack.c.h.b16 %v618
    %v1072 = vunpack.c.l.b16 %v619
    %v1073 = vunpack.c.h.b16 %v619
    %v1074 = vunpack.c.l.b16 %v620
    %v1075 = vunpack.c.h.b16 %v620
    %v1076 = vunpack.c.l.b16 %v621
    %v1077 = vunpack.c.h.b16 %v621
    %v1078 = vunpack.c.l.b16 %v622
    %v1079 = vunpack.c.h.b16 %v622
    %v1080 = vunpack.c.l.b16 %v623
    %v1081 = vunpack.c.h.b16 %v623
    %v1082 = vunpack.c.l.b16 %v624
    %v1083 = vunpack.c.h.b16 %v624
    %v1084 = vunpack.c.l.b16 %v625
    %v1085 = vunpack.c.h.b16 %v625
    %v1086 = vunpack.c.l.b16 %v626
    %v1087 = vunpack.c.h.b16 %v626
    %v1088 = vunpack.c.l.b16 %v627
    %v1089 = vunpack.c.h.b16 %v627
    %v1090 = vunpack.c.l.b16 %v628
    %v1091 = vunpack.c.h.b16 %v628
    %v1092 = vunpack.c.l.b16 %v629
    %v1093 = vunpack.c.h.b16 %v629
    %v1094 = vunpack.c.l.b16 %v630
    %v1095 = vunpack.c.h.b16 %v630
    %v1096 = vunpack.c.l.b16 %v631
    %v1097 = vunpack.c.h.b16 %v631
    %v1098 = vunpack.c.l.b16 %v632
    %v1099 = vunpack.c.h.b16 %v632
    %v1100 = vunpack.c.l.b16 %v633
    %v1101 = vunpack.c.h.b16 %v633
    %v1102 = vunpack.c.l.b16 %v634
    %v1103 = vunpack.c.h.b16 %v634
    %v1104 = vunpack.c.l.b16 %v635
    %v1105 = vunpack.c.h.b16 %v635
    %v1106 = vunpack.c.l.b16 %v636
    %v1107 = vunpack.c.h.b16 %v636
    %v1108 = vunpack.c.l.b16 %v637
    %v1109 = vunpack.c.h.b16 %v637
    %v1110 = vunpack.c.l.b16 %v638
    %v1111 = vunpack.c.h.b16 %v638
    %v1112 = vunpack.c.l.b16 %v639
    %v1113 = vunpack.c.h.b16 %v639
    %v1114 = vunpack.c.l.b16 %v640
    %v1115 = vunpack.c.h.b16 %v640
    %v1116 = vunpack.c.l.b16 %v641
    %v1117 = vunpack.c.h.b16 %v641
    %v1118 = vunpack.c.l.b16 %v642
    %v1119 = vunpack.c.h.b16 %v642
    %v1120 = vunpack.c.l.b16 %v643
    %v1121 = vunpack.c.h.b16 %v643
    %v1122 = vunpack.c.l.b16 %v644
    %v1123 = vunpack.c.h.b16 %v644
    %v1124 = vunpack.c.l.b16 %v645
    %v1125 = vunpack.c.h.b16 %v645
    %v1126 = vunpack.c.l.b16 %v646
    %v1127 = vunpack.c.h.b16 %v646
    %v1128 = vunpack.c.l.b16 %v647
    %v1129 = vunpack.c.h.b16 %v647
    %v1130 = vunpack.c.l.b16 %v648
    %v1131 = vunpack.c.h.b16 %v648
    %v1132 = vunpack.c.l.b16 %v649
    %v1133 = vunpack.c.h.b16 %v649
    %v1134 = vunpack.c.l.b16 %v650
    %v1135 = vunpack.c.h.b16 %v650
    %v1136 = vunpack.c.l.b16 %v651
    %v1137 = vunpack.c.h.b16 %v651
    %v1138 = vunpack.c.l.b16 %v652
    %v1139 = vunpack.c.h.b16 %v652
    %v1140 = vunpack.c.l.b16 %v653
    %v1141 = vunpack.c.h.b16 %v653
    %v1142 = vunpack.c.l.b16 %v654
    %v1143 = vunpack.c.h.b16 %v654
    %v1144 = vunpack.c.l.b16 %v655
    %v1145 = vunpack.c.h.b16 %v655
    %v1146 = vunpack.c.l.b16 %v656
    %v1147 = vunpack.c.h.b16 %v656
    %v1148 = vunpack.c.l.b16 %v657
    %v1149 = vunpack.c.h.b16 %v657
    %v1150 = vunpack.c.l.b16 %v658
    %v1151 = vunpack.c.h.b16 %v658
    %v1152 = vunpack.c.l.b16 %v659
    %v1153 = vunpack.c.h.b16 %v659
    %v1154 = vunpack.c.l.b16 %v660
    %v1155 = vunpack.c.h.b16 %v660
    %v1156 = vunpack.c.l.b16 %v661
    %v1157 = vunpack.c.h.b16 %v661
    %v1158 = vunpack.c.l.b16 %v662
    %v1159 = vunpack.c.h.b16 %v662
    %v1160 = vunpack.c.l.b16 %v663
    %v1161 = vunpack.c.h.b16 %v663
    %v1162 = vunpack.c.l.b16 %v664
    %v1163 = vunpack.c.h.b16 %v664
    %v1164 = vunpack.c.l.b16 %v665
    %v1165 = vunpack.c.h.b16 %v665
    %v1166 = vunpack.c.l.b16 %v666
    %v1167 = vunpack.c.h.b16 %v666
    %v1168 = vunpack.c.l.b16 %v667
    %v1169 = vunpack.c.h.b16 %v667
    %v1170 = vunpack.c.l.b16 %v668
    %v1171 = vunpack.c.h.b16 %v668
    %v1172 = vunpack.c.l.b16 %v669
    %v1173 = vunpack.c.h.b16 %v669
    %v1174 = vunpack.c.l.b16 %v670
    %v1175 = vunpack.c.h.b16 %v670
    %v1176 = vunpack.c.l.b16 %v671
    %v1177 = vunpack.c.h.b16 %v671
    %v1178 = vunpack.c.l.b16 %v672
    %v1179 = vunpack.c.h.b16 %v672
    %v1180 = vunpack.c.l.b16 %v673
    %v1181 = vunpack.c.h.b16 %v673
    %v1182 = vunpack.c.l.b16 %v674
    %v1183 = vunpack.c.h.b16 %v674
    %v1184 = vunpack.c.l.b16 %v675
    %v1185 = vunpack.c.h.b16 %v675
    %v1186 = vunpack.c.l.b16 %v676
    %v1187 = vunpack.c.h.b16 %v676
    %v1188 = vunpack.c.l.b16 %v677
    %v1189 = vunpack.c.h.b16 %v677
    %v1190 = vunpack.c.l.b16 %v678
    %v1191 = vunpack.c.h.b16 %v678
    %v1192 = vunpack.c.l.b16 %v679
    %v1193 = vunpack.c.h.b16 %v679
    %v1194 = vunpack.c.l.b16 %v680
    %v1195 = vunpack.c.h.b16 %v680
    %v1196 = vunpack.c.l.b16 %v681
    %v1197 = vunpack.c.h.b16 %v681
    %v1198 = vunpack.c.l.b16 %v682
    %v1199 = vunpack.c.h.b16 %v682
    %v1200 = vunpack.c.l.b16 %v683
    %v1201 = vunpack.c.h.b16 %v683
    %v1202 = vunpack.c.l.b16 %v684
    %v1203 = vunpack.c.h.b16 %v684
    %v1204 = vunpack.c.l.b16 %v685
    %v1205 = vunpack.c.h.b16 %v685
    %v1206 = vunpack.c.l.b16 %v686
    %v1207 = vunpack.c.h.b16 %v686
    %v1208 = vunpack.c.l.b16 %v687
    %v1209 = vunpack.c.h.b16 %v687
    %v1210 = vunpack.c.l.b16 %v688
    %v1211 = vunpack.c.h.b16 %v688
    %v1212 = vunpack.c.l.b16 %v689
    %v1213 = vunpack.c.h.b16 %v689
    %v1214 = vunpack.c.l.b16 %v690
    %v1215 = vunpack.c.h.b16 %v690
    %v1216 = vunpack.c.l.b16 %v691
    %v1217 = vunpack.c.h.b16 %v691
    %v1218 = vunpack.c.l.b16 %v692
    %v1219 = vunpack.c.h.b16 %v692
    %v1220 = vunpack.c.l.b16 %v693
    %v1221 = vunpack.c.h.b16 %v693
    %v1222 = vunpack.c.l.b16 %v694
    %v1223 = vunpack.c.h.b16 %v694
    %v1224 = vunpack.c.l.b16 %v695
    %v1225 = vunpack.c.h.b16 %v695
    %v1226 = vunpack.c.l.b16 %v696
    %v1227 = vunpack.c.h.b16 %v696
    %v1228 = vunpack.c.l.b16 %v697
    %v1229 = vunpack.c.h.b16 %v697
    %v1230 = vunpack.c.l.b16 %v698
    %v1231 = vunpack.c.h.b16 %v698
    %v1232 = vunpack.c.l.b16 %v699
    %v1233 = vunpack.c.h.b16 %v699
    %v1234 = vunpack.c.l.b16 %v700
    %v1235 = vunpack.c.h.b16 %v700
    %v1236 = vunpack.c.l.b16 %v701
    %v1237 = vunpack.c.h.b16 %v701
    %v1238 = vunpack.c.l.b16 %v702
    %v1239 = vunpack.c.h.b16 %v702
    %v1240 = vunpack.c.l.b16 %v703
    %v1241 = vunpack.c.h.b16 %v703
    %v1242 = vunpack.c.l.b16 %v704
    %v1243 = vunpack.c.h.b16 %v704
    %v1244 = vunpack.c.l.b16 %v705
    %v1245 = vunpack.c.h.b16 %v705
    %v1246 = vunpack.c.l.b16 %v706
    %v1247 = vunpack.c.h.b16 %v706
    %v1248 = vunpack.c.l.b16 %v707
    %v1249 = vunpack.c.h.b16 %v707
    %v1250 = vunpack.c.l.b16 %v708
    %v1251 = vunpack.c.h.b16 %v708
    %v1252 = vunpack.c.l.b16 %v709
    %v1253 = vunpack.c.h.b16 %v709
    %v1254 = vunpack.c.l.b16 %v710
    %v1255 = vunpack.c.h.b16 %v710
    %v1256 = vunpack.c.l.b16 %v711
    %v1257 = vunpack.c.h.b16 %v711
    %v1258 = vunpack.c.l.b16 %v712
    %v1259 = vunpack.c.h.b16 %v712
    %v1260 = vunpack.c.l.b16 %v713
    %v1261 = vunpack.c.h.b16 %v713
    %v1262 = vunpack.c.l.b16 %v714
    %v1263 = vunpack.c.h.b16 %v714
    %v1264 = vunpack.c.l.b16 %v715
    %v1265 = vunpack.c.h.b16 %v715
    %v1266 = vunpack.c.l.b16 %v716
    %v1267 = vunpack.c.h.b16 %v716
    %v1268 = vunpack.c.l.b16 %v717
    %v1269 = vunpack.c.h.b16 %v717
    %v1270 = vunpack.c.l.b16 %v718
    %v1271 = vunpack.c.h.b16 %v718
    %v1272 = vunpack.c.l.b16 %v719
    %v1273 = vunpack.c.h.b16 %v719
    %v1274 = vunpack.c.l.b16 %v720
    %v1275 = vunpack.c.h.b16 %v720
    %v1276 = vunpack.c.l.b16 %v721
    %v1277 = vunpack.c.h.b16 %v721
    %v1278 = vunpack.c.l.b16 %v722
    %v1279 = vunpack.c.h.b16 %v722
    %v1280 = vunpack.c.l.b16 %v723
    %v1281 = vunpack.c.h.b16 %v723
    %v1282 = vunpack.c.l.b16 %v724
    %v1283 = vunpack.c.h.b16 %v724
    %v1284 = vunpack.c.l.b16 %v725
    %v1285 = vunpack.c.h.b16 %v725
    %v1286 = vunpack.c.l.b16 %v726
    %v1287 = vunpack.c.h.b16 %v726
    %v1288 = vunpack.c.l.b16 %v727
    %v1289 = vunpack.c.h.b16 %v727
    %v1290 = vunpack.c.l.b16 %v728
    %v1291 = vunpack.c.h.b16 %v728
    %v1292 = vunpack.c.l.b16 %v729
    %v1293 = vunpack.c.h.b16 %v729
    %v1294 = vunpack.c.l.b16 %v730
    %v1295 = vunpack.c.h.b16 %v730
    %v1296 = vunpack.c.l.b16 %v731
    %v1297 = vunpack.c.h.b16 %v731
    %v1298 = vunpack.c.l.b16 %v732
    %v1299 = vunpack.c.h.b16 %v732
    %v1300 = vunpack.c.l.b16 %v733
    %v1301 = vunpack.c.h.b16 %v733
    %v1302 = vunpack.c.l.b16 %v734
    %v1303 = vunpack.c.h.b16 %v734
    %v1304 = vunpack.c.l.b16 %v735
    %v1305 = vunpack.c.h.b16 %v735
    %v1306 = vunpack.c.l.b16 %v736
    %v1307 = vunpack.c.h.b16 %v736
    %v1308 = vunpack.c.l.b16 %v737
    %v1309 = vunpack.c.h.b16 %v737
    %v1310 = vunpack.c.l.b16 %v738
    %v1311 = vunpack.c.h.b16 %v738
    %v1312 = vunpack.c.l.b16 %v739
    %v1313 = vunpack.c.h.b16 %v739
    %v1314 = vunpack.c.l.b16 %v740
    %v1315 = vunpack.c.h.b16 %v740
    %v1316 = vunpack.c.l.b16 %v741
    %v1317 = vunpack.c.h.b16 %v741
    %v1318 = vunpack.c.l.b16 %v742
    %v1319 = vunpack.c.h.b16 %v742
    %v1320 = vunpack.c.l.b16 %v743
    %v1321 = vunpack.c.h.b16 %v743
    %v1322 = vunpack.c.l.b16 %v744
    %v1323 = vunpack.c.h.b16 %v744
    %v1324 = vunpack.c.l.b16 %v745
    %v1325 = vunpack.c.h.b16 %v745
    %v1326 = vunpack.c.l.b16 %v746
    %v1327 = vunpack.c.h.b16 %v746
    %v1328 = vunpack.c.l.b16 %v747
    %v1329 = vunpack.c.h.b16 %v747
    %v1330 = vunpack.c.l.b16 %v748
    %v1331 = vunpack.c.h.b16 %v748
    %v1332 = vunpack.c.l.b16 %v749
    %v1333 = vunpack.c.h.b16 %v749
    %v1334 = vunpack.c.l.b16 %v750
    %v1335 = vunpack.c.h.b16 %v750
    %v1336 = vunpack.c.l.b16 %v751
    %v1337 = vunpack.c.h.b16 %v751
    %v1338 = vunpack.c.l.b16 %v752
    %v1339 = vunpack.c.h.b16 %v752
    %v1340 = vunpack.c.l.b16 %v753
    %v1341 = vunpack.c.h.b16 %v753
    %v1342 = vunpack.c.l.b16 %v754
    %v1343 = vunpack.c.h.b16 %v754
    %v1344 = vunpack.c.l.b16 %v755
    %v1345 = vunpack.c.h.b16 %v755
    %v1346 = vunpack.c.l.b16 %v756
    %v1347 = vunpack.c.h.b16 %v756
    %v1348 = vunpack.c.l.b16 %v757
    %v1349 = vunpack.c.h.b16 %v757
    %v1350 = vunpack.c.l.b16 %v758
    %v1351 = vunpack.c.h.b16 %v758
    %v1352 = vunpack.c.l.b16 %v759
    %v1353 = vunpack.c.h.b16 %v759
    %v1354 = vunpack.c.l.b16 %v760
    %v1355 = vunpack.c.h.b16 %v760
    %v1356 = vunpack.c.l.b16 %v761
    %v1357 = vunpack.c.h.b16 %v761
    %v1358 = vunpack.c.l.b16 %v762
    %v1359 = vunpack.c.h.b16 %v762
    %v1360 = vunpack.c.l.b16 %v763
    %v1361 = vunpack.c.h.b16 %v763
    %v1362 = vunpack.c.l.b16 %v764
    %v1363 = vunpack.c.h.b16 %v764
    %v1364 = vunpack.c.l.b16 %v765
    %v1365 = vunpack.c.h.b16 %v765
    %v1366 = vunpack.c.l.b16 %v766
    %v1367 = vunpack.c.h.b16 %v766
    %v1368 = vunpack.c.l.b16 %v767
    %v1369 = vunpack.c.h.b16 %v767
    %v1370 = vunpack.c.l.b16 %v768
    %v1371 = vunpack.c.h.b16 %v768
    %v1372 = vunpack.c.l.b16 %v769
    %v1373 = vunpack.c.h.b16 %v769
    %v1374 = vunpack.c.l.b16 %v770
    %v1375 = vunpack.c.h.b16 %v770
    %v1376 = vunpack.c.l.b16 %v771
    %v1377 = vunpack.c.h.b16 %v771
    %v1378 = vunpack.c.l.b16 %v772
    %v1379 = vunpack.c.h.b16 %v772
    %v1380 = vunpack.c.l.b16 %v773
    %v1381 = vunpack.c.h.b16 %v773
    %v1382 = vpack.c.b16 %v1004, %v998
    %v1383 = vpack.c.b16 %v1005, %v999
    %v1384 = vpack.c.b16 %v1006, %v1000
    %v1385 = vpack.c.b16 %v1007, %v1001
    %v1386 = vpack.c.b16 %v1008, %v1002
    %v1387 = vpack.c.b16 %v1009, %v1003
    %v1388 = vpack.c.b16 %v1016, %v1010
    %v1389 = vpack.c.b16 %v1017, %v1011
    %v1390 = vpack.c.b16 %v1018, %v1012
    %v1391 = vpack.c.b16 %v1019, %v1013
    %v1392 = vpack.c.b16 %v1020, %v1014
    %v1393 = vpack.c.b16 %v1021, %v1015
    %v1394 = vpack.c.b16 %v1028, %v1022
    %v1395 = vpack.c.b16 %v1029, %v1023
    %v1396 = vpack.c.b16 %v1030, %v1024
    %v1397 = vpack.c.b16 %v1031, %v1025
    %v1398 = vpack.c.b16 %v1032, %v1026
    %v1399 = vpack.c.b16 %v1033, %v1027
    %v1400 = vpack.c.b16 %v1040, %v1034
    %v1401 = vpack.c.b16 %v1041, %v1035
    %v1402 = vpack.c.b16 %v1042, %v1036
    %v1403 = vpack.c.b16 %v1043, %v1037
    %v1404 = vpack.c.b16 %v1044, %v1038
    %v1405 = vpack.c.b16 %v1045, %v1039
    %v1406 = vpack.c.b16 %v1052, %v1046
    %v1407 = vpack.c.b16 %v1053, %v1047
    %v1408 = vpack.c.b16 %v1054, %v1048
    %v1409 = vpack.c.b16 %v1055, %v1049
    %v1410 = vpack.c.b16 %v1056, %v1050
    %v1411 = vpack.c.b16 %v1057, %v1051
    %v1412 = vpack.c.b16 %v1064, %v1058
    %v1413 = vpack.c.b16 %v1065, %v1059
    %v1414 = vpack.c.b16 %v1066, %v1060
    %v1415 = vpack.c.b16 %v1067, %v1061
    %v1416 = vpack.c.b16 %v1068, %v1062
    %v1417 = vpack.c.b16 %v1069, %v1063
    %v1418 = vpack.c.b16 %v1076, %v1070
    %v1419 = vpack.c.b16 %v1077, %v1071
    %v1420 = vpack.c.b16 %v1078, %v1072
    %v1421 = vpack.c.b16 %v1079, %v1073
    %v1422 = vpack.c.b16 %v1080, %v1074
    %v1423 = vpack.c.b16 %v1081, %v1075
    %v1424 = vpack.c.b16 %v1088, %v1082
    %v1425 = vpack.c.b16 %v1089, %v1083
    %v1426 = vpack.c.b16 %v1090, %v1084
    %v1427 = vpack.c.b16 %v1091, %v1085
    %v1428 = vpack.c.b16 %v1092, %v1086
    %v1429 = vpack.c.b16 %v1093, %v1087
    %v1430 = vpack.c.b16 %v1100, %v1094
    %v1431 = vpack.c.b16 %v1101, %v1095
    %v1432 = vpack.c.b16 %v1102, %v1096
    %v1433 = vpack.c.b16 %v1103, %v1097
    %v1434 = vpack.c.b16 %v1104, %v1098
    %v1435 = vpack.c.b16 %v1105, %v1099
    %v1436 = vpack.c.b16 %v1112, %v1106
    %v1437 = vpack.c.b16 %v1113, %v1107
    %v1438 = vpack.c.b16 %v1114, %v1108
    %v1439 = vpack.c.b16 %v1115, %v1109
    %v1440 = vpack.c.b16 %v1116, %v1110
    %v1441 = vpack.c.b16 %v1117, %v1111
    %v1442 = vpack.c.b16 %v1124, %v1118
    %v1443 = vpack.c.b16 %v1125, %v1119
    %v1444 = vpack.c.b16 %v1126, %v1120
    %v1445 = vpack.c.b16 %v1127, %v1121
    %v1446 = vpack.c.b16 %v1128, %v1122
    %v1447 = vpack.c.b16 %v1129, %v1123
    %v1448 = vpack.c.b16 %v1136, %v1130
    %v1449 = vpack.c.b16 %v1137, %v1131
    %v1450 = vpack.c.b16 %v1138, %v1132
    %v1451 = vpack.c.b16 %v1139, %v1133
    %v1452 = vpack.c.b16 %v1140, %v1134
    %v1453 = vpack.c.b16 %v1141, %v1135
    %v1454 = vpack.c.b16 %v1148, %v1142
    %v1455 = vpack.c.b16 %v1149, %v1143
    %v1456 = vpack.c.b16 %v1150, %v1144
    %v1457 = vpack.c.b16 %v1151, %v1145
    %v1458 = vpack.c.b16 %v1152, %v1146
    %v1459 = vpack.c.b16 %v1153, %v1147
    %v1460 = vpack.c.b16 %v1160, %v1154
    %v1461 = vpack.c.b16 %v1161, %v1155
    %v1462 = vpack.c.b16 %v1162, %v1156
    %v1463 = vpack.c.b16 %v1163, %v1157
    %v1464 = vpack.c.b16 %v1164, %v1158
    %v1465 = vpack.c.b16 %v1165, %v1159
    %v1466 = vpack.c.b16 %v1172, %v1166
    %v1467 = vpack.c.b16 %v1173, %v1167
    %v1468 = vpack.c.b16 %v1174, %v1168
    %v1469 = vpack.c.b16 %v1175, %v1169
    %v1470 = vpack.c.b16 %v1176, %v1170
    %v1471 = vpack.c.b16 %v1177, %v1171
    %v1472 = vpack.c.b16 %v1184, %v1178
    %v1473 = vpack.c.b16 %v1185, %v1179
    %v1474 = vpack.c.b16 %v1186, %v1180
    %v1475 = vpack.c.b16 %v1187, %v1181
    %v1476 = vpack.c.b16 %v1188, %v1182
    %v1477 = vpack.c.b16 %v1189, %v1183
    %v1478 = vpack.c.b16 %v1196, %v1190
    %v1479 = vpack.c.b16 %v1197, %v1191
    %v1480 = vpack.c.b16 %v1198, %v1192
    %v1481 = vpack.c.b16 %v1199, %v1193
    %v1482 = vpack.c.b16 %v1200, %v1194
    %v1483 = vpack.c.b16 %v1201, %v1195
    %v1484 = vpack.c.b16 %v1208, %v1202
    %v1485 = vpack.c.b16 %v1209, %v1203
    %v1486 = vpack.c.b16 %v1210, %v1204
    %v1487 = vpack.c.b16 %v1211, %v1205
    %v1488 = vpack.c.b16 %v1212, %v1206
    %v1489 = vpack.c.b16 %v1213, %v1207
    %v1490 = vpack.c.b16 %v1220, %v1214
    %v1491 = vpack.c.b16 %v1221, %v1215
    %v1492 = vpack.c.b16 %v1222, %v1216
    %v1493 = vpack.c.b16 %v1223, %v1217
    %v1494 = vpack.c.b16 %v1224, %v1218
    %v1495 = vpack.c.b16 %v1225, %v1219
    %v1496 = vpack.c.b16 %v1232, %v1226
    %v1497 = vpack.c.b16 %v1233, %v1227
    %v1498 = vpack.c.b16 %v1234, %v1228
    %v1499 = vpack.c.b16 %v1235, %v1229
    %v1500 = vpack.c.b16 %v1236, %v1230
    %v1501 = vpack.c.b16 %v1237, %v1231
    %v1502 = vpack.c.b16 %v1244, %v1238
    %v1503 = vpack.c.b16 %v1245, %v1239
    %v1504 = vpack.c.b16 %v1246, %v1240
    %v1505 = vpack.c.b16 %v1247, %v1241
    %v1506 = vpack.c.b16 %v1248, %v1242
    %v1507 = vpack.c.b16 %v1249, %v1243
    %v1508 = vpack.c.b16 %v1256, %v1250
    %v1509 = vpack.c.b16 %v1257, %v1251
    %v1510 = vpack.c.b16 %v1258, %v1252
    %v1511 = vpack.c.b16 %v1259, %v1253
    %v1512 = vpack.c.b16 %v1260, %v1254
    %v1513 = vpack.c.b16 %v1261, %v1255
    %v1514 = vpack.c.b16 %v1268, %v1262
    %v1515 = vpack.c.b16 %v1269, %v1263
    %v1516 = vpack.c.b16 %v1270, %v1264
    %v1517 = vpack.c.b16 %v1271, %v1265
    %v1518 = vpack.c.b16 %v1272, %v1266
    %v1519 = vpack.c.b16 %v1273, %v1267
    %v1520 = vpack.c.b16 %v1280, %v1274
    %v1521 = vpack.c.b16 %v1281, %v1275
    %v1522 = vpack.c.b16 %v1282, %v1276
    %v1523 = vpack.c.b16 %v1283, %v1277
    %v1524 = vpack.c.b16 %v1284, %v1278
    %v1525 = vpack.c.b16 %v1285, %v1279
    %v1526 = vpack.c.b16 %v1292, %v1286
    %v1527 = vpack.c.b16 %v1293, %v1287
    %v1528 = vpack.c.b16 %v1294, %v1288
    %v1529 = vpack.c.b16 %v1295, %v1289
    %v1530 = vpack.c.b16 %v1296, %v1290
    %v1531 = vpack.c.b16 %v1297, %v1291
    %v1532 = vpack.c.b16 %v1304, %v1298
    %v1533 = vpack.c.b16 %v1305, %v1299
    %v1534 = vpack.c.b16 %v1306, %v1300
    %v1535 = vpack.c.b16 %v1307, %v1301
    %v1536 = vpack.c.b16 %v1308, %v1302
    %v1537 = vpack.c.b16 %v1309, %v1303
    %v1538 = vpack.c.b16 %v1316, %v1310
    %v1539 = vpack.c.b16 %v1317, %v1311
    %v1540 = vpack.c.b16 %v1318, %v1312
    %v1541 = vpack.c.b16 %v1319, %v1313
    %v1542 = vpack.c.b16 %v1320, %v1314
    %v1543 = vpack.c.b16 %v1321, %v1315
    %v1544 = vpack.c.b16 %v1328, %v1322
    %v1545 = vpack.c.b16 %v1329, %v1323
    %v1546 = vpack.c.b16 %v1330, %v1324
    %v1547 = vpack.c.b16 %v1331, %v1325
    %v1548 = vpack.c.b16 %v1332, %v1326
    %v1549 = vpack.c.b16 %v1333, %v1327
    %v1550 = vpack.c.b16 %v1340, %v1334
    %v1551 = vpack.c.b16 %v1341, %v1335
    %v1552 = vpack.c.b16 %v1342, %v1336
    %v1553 = vpack.c.b16 %v1343, %v1337
    %v1554 = vpack.c.b16 %v1344, %v1338
    %v1555 = vpack.c.b16 %v1345, %v1339
    %v1556 = vpack.c.b16 %v1352, %v1346
    %v1557 = vpack.c.b16 %v1353, %v1347
    %v1558 = vpack.c.b16 %v1354, %v1348
    %v1559 = vpack.c.b16 %v1355, %v1349
    %v1560 = vpack.c.b16 %v1356, %v1350
    %v1561 = vpack.c.b16 %v1357, %v1351
    %v1562 = vpack.c.b16 %v1364, %v1358
    %v1563 = vpack.c.b16 %v1365, %v1359
    %v1564 = vpack.c.b16 %v1366, %v1360
    %v1565 = vpack.c.b16 %v1367, %v1361
    %v1566 = vpack.c.b16 %v1368, %v1362
    %v1567 = vpack.c.b16 %v1369, %v1363
    %v1568 = vpack.c.b16 %v1376, %v1370
    %v1569 = vpack.c.b16 %v1377, %v1371
    %v1570 = vpack.c.b16 %v1378, %v1372
    %v1571 = vpack.c.b16 %v1379, %v1373
    %v1572 = vpack.c.b16 %v1380, %v1374
    %v1573 = vpack.c.b16 %v1381, %v1375
    %1766 = vmatprep.subr.bf16.mxu0 %v1425
    %1767 = vmatpush1.bf16.msra.mxu0 %v1424
    %1768 = vmatprep.subr.bf16.mxu0 %v1419
    %1769 = vmatpush1.bf16.msra.mxu0 %v1418
    %1770 = vmatprep.subr.bf16.mxu0 %v1413
    %1771 = vmatpush1.bf16.msra.mxu0 %v1412
    %1772 = vmatprep.subr.bf16.mxu0 %v1407
    %1773 = vmatpush1.bf16.msra.mxu0 %v1406
    %1774 = vmatprep.subr.bf16.mxu0 %v1401
    %1775 = vmatpush1.bf16.msra.mxu0 %v1400
    %1776 = vmatprep.subr.bf16.mxu0 %v1395
    %1777 = vmatpush1.bf16.msra.mxu0 %v1394
    %1778 = vmatprep.subr.bf16.mxu0 %v1389
    %1779 = vmatpush1.bf16.msra.mxu0 %v1388
    %1780 = vmatprep.subr.bf16.mxu0 %v1383
    %1781 = vmatpush1.bf16.msra.mxu0 %v1382
    %1782 = vmatprep.subr.bf16.mxu0 %v1473
    %1783 = vmatpush2.bf16.msra.mxu0 %v1472
    %1784 = vmatprep.subr.bf16.mxu0 %v1467
    %1785 = vmatpush2.bf16.msra.mxu0 %v1466
    %1786 = vmatprep.subr.bf16.mxu0 %v1461
    %1787 = vmatpush2.bf16.msra.mxu0 %v1460
    %1788 = vmatprep.subr.bf16.mxu0 %v1455
    %1789 = vmatpush2.bf16.msra.mxu0 %v1454
    %1790 = vmatprep.subr.bf16.mxu0 %v1449
    %1791 = vmatpush2.bf16.msra.mxu0 %v1448
    %1792 = vmatprep.subr.bf16.mxu0 %v1443
    %1793 = vmatpush2.bf16.msra.mxu0 %v1442
    %1794 = vmatprep.subr.bf16.mxu0 %v1437
    %1795 = vmatpush2.bf16.msra.mxu0 %v1436
    %1796 = vmatprep.subr.bf16.mxu0 %v1431
    %1797 = vmatpush2.bf16.msra.mxu0 %v1430
    %1798 = vmatprep.mubr.bf16.mxu0 %v579
    %1799 = vmatmul.mubr.bf16.gmra.mxu0 %v578
    %v1800 = vpop.f32.mrf.mxu0
    %v1801 = vadd.f32 %v779, %v1800
    %v1802 = vpop.f32.mrf.mxu0
    %v1803 = vadd.f32 %v783, %v1802
    %v1804 = vpop.f32.mrf.mxu0
    %v1805 = vadd.f32 %v779, %v1804
    %v1806 = vpop.f32.mrf.mxu0
    %v1807 = vadd.f32 %v783, %v1806
    %1808 = vdwg.mxu0
    %1809 = vmatprep.subr.bf16.mxu0 %v1521
    %1810 = vmatpush1.bf16.msra.mxu0 %v1520
    %1811 = vmatprep.subr.bf16.mxu0 %v1515
    %1812 = vmatpush1.bf16.msra.mxu0 %v1514
    %1813 = vmatprep.subr.bf16.mxu0 %v1509
    %1814 = vmatpush1.bf16.msra.mxu0 %v1508
    %1815 = vmatprep.subr.bf16.mxu0 %v1503
    %1816 = vmatpush1.bf16.msra.mxu0 %v1502
    %1817 = vmatprep.subr.bf16.mxu0 %v1497
    %1818 = vmatpush1.bf16.msra.mxu0 %v1496
    %1819 = vmatprep.subr.bf16.mxu0 %v1491
    %1820 = vmatpush1.bf16.msra.mxu0 %v1490
    %1821 = vmatprep.subr.bf16.mxu0 %v1485
    %1822 = vmatpush1.bf16.msra.mxu0 %v1484
    %1823 = vmatprep.subr.bf16.mxu0 %v1479
    %1824 = vmatpush1.bf16.msra.mxu0 %v1478
    %1825 = vmatprep.subr.bf16.mxu0 %v1569
    %1826 = vmatpush2.bf16.msra.mxu0 %v1568
    %1827 = vmatprep.subr.bf16.mxu0 %v1563
    %1828 = vmatpush2.bf16.msra.mxu0 %v1562
    %1829 = vmatprep.subr.bf16.mxu0 %v1557
    %1830 = vmatpush2.bf16.msra.mxu0 %v1556
    %1831 = vmatprep.subr.bf16.mxu0 %v1551
    %1832 = vmatpush2.bf16.msra.mxu0 %v1550
    %1833 = vmatprep.subr.bf16.mxu0 %v1545
    %1834 = vmatpush2.bf16.msra.mxu0 %v1544
    %1835 = vmatprep.subr.bf16.mxu0 %v1539
    %1836 = vmatpush2.bf16.msra.mxu0 %v1538
    %1837 = vmatprep.subr.bf16.mxu0 %v1533
    %1838 = vmatpush2.bf16.msra.mxu0 %v1532
    %1839 = vmatprep.subr.bf16.mxu0 %v1527
    %1840 = vmatpush2.bf16.msra.mxu0 %v1526
    %1841 = vmatprep.mubr.bf16.mxu0 %v581
    %1842 = vmatmul.mubr.bf16.gmra.mxu0 %v580
    %v1843 = vpop.f32.mrf.mxu0
    %v1844 = vadd.f32 %v1801, %v1843
    %v1845 = vpop.f32.mrf.mxu0
    %v1846 = vadd.f32 %v1803, %v1845
    %v1847 = vpop.f32.mrf.mxu0
    %v1848 = vadd.f32 %v1805, %v1847
    %v1849 = vpop.f32.mrf.mxu0
    %v1850 = vadd.f32 %v1807, %v1849
    %1851 = vdwg.mxu0
    %1852 = vmatprep.subr.bf16.mxu0 %v1427
    %1853 = vmatpush1.bf16.msra.mxu0 %v1426
    %1854 = vmatprep.subr.bf16.mxu0 %v1421
    %1855 = vmatpush1.bf16.msra.mxu0 %v1420
    %1856 = vmatprep.subr.bf16.mxu0 %v1415
    %1857 = vmatpush1.bf16.msra.mxu0 %v1414
    %1858 = vmatprep.subr.bf16.mxu0 %v1409
    %1859 = vmatpush1.bf16.msra.mxu0 %v1408
    %1860 = vmatprep.subr.bf16.mxu0 %v1403
    %1861 = vmatpush1.bf16.msra.mxu0 %v1402
    %1862 = vmatprep.subr.bf16.mxu0 %v1397
    %1863 = vmatpush1.bf16.msra.mxu0 %v1396
    %1864 = vmatprep.subr.bf16.mxu0 %v1391
    %1865 = vmatpush1.bf16.msra.mxu0 %v1390
    %1866 = vmatprep.subr.bf16.mxu0 %v1385
    %1867 = vmatpush1.bf16.msra.mxu0 %v1384
    %1868 = vmatprep.subr.bf16.mxu0 %v1475
    %1869 = vmatpush2.bf16.msra.mxu0 %v1474
    %1870 = vmatprep.subr.bf16.mxu0 %v1469
    %1871 = vmatpush2.bf16.msra.mxu0 %v1468
    %1872 = vmatprep.subr.bf16.mxu0 %v1463
    %1873 = vmatpush2.bf16.msra.mxu0 %v1462
    %1874 = vmatprep.subr.bf16.mxu0 %v1457
    %1875 = vmatpush2.bf16.msra.mxu0 %v1456
    %1876 = vmatprep.subr.bf16.mxu0 %v1451
    %1877 = vmatpush2.bf16.msra.mxu0 %v1450
    %1878 = vmatprep.subr.bf16.mxu0 %v1445
    %1879 = vmatpush2.bf16.msra.mxu0 %v1444
    %1880 = vmatprep.subr.bf16.mxu0 %v1439
    %1881 = vmatpush2.bf16.msra.mxu0 %v1438
    %1882 = vmatprep.subr.bf16.mxu0 %v1433
    %1883 = vmatpush2.bf16.msra.mxu0 %v1432
    %1884 = vmatprep.mubr.bf16.mxu0 %v579
    %1885 = vmatmul.mubr.bf16.gmra.mxu0 %v578
    %v1886 = vpop.f32.mrf.mxu0
    %v1887 = vadd.f32 %v787, %v1886
    %v1888 = vpop.f32.mrf.mxu0
    %v1889 = vadd.f32 %v791, %v1888
    %v1890 = vpop.f32.mrf.mxu0
    %v1891 = vadd.f32 %v787, %v1890
    %v1892 = vpop.f32.mrf.mxu0
    %v1893 = vadd.f32 %v791, %v1892
    %1894 = vdwg.mxu0
    %1895 = vmatprep.subr.bf16.mxu0 %v1523
    %1896 = vmatpush1.bf16.msra.mxu0 %v1522
    %1897 = vmatprep.subr.bf16.mxu0 %v1517
    %1898 = vmatpush1.bf16.msra.mxu0 %v1516
    %1899 = vmatprep.subr.bf16.mxu0 %v1511
    %1900 = vmatpush1.bf16.msra.mxu0 %v1510
    %1901 = vmatprep.subr.bf16.mxu0 %v1505
    %1902 = vmatpush1.bf16.msra.mxu0 %v1504
    %1903 = vmatprep.subr.bf16.mxu0 %v1499
    %1904 = vmatpush1.bf16.msra.mxu0 %v1498
    %1905 = vmatprep.subr.bf16.mxu0 %v1493
    %1906 = vmatpush1.bf16.msra.mxu0 %v1492
    %1907 = vmatprep.subr.bf16.mxu0 %v1487
    %1908 = vmatpush1.bf16.msra.mxu0 %v1486
    %1909 = vmatprep.subr.bf16.mxu0 %v1481
    %1910 = vmatpush1.bf16.msra.mxu0 %v1480
    %1911 = vmatprep.subr.bf16.mxu0 %v1571
    %1912 = vmatpush2.bf16.msra.mxu0 %v1570
    %1913 = vmatprep.subr.bf16.mxu0 %v1565
    %1914 = vmatpush2.bf16.msra.mxu0 %v1564
    %1915 = vmatprep.subr.bf16.mxu0 %v1559
    %1916 = vmatpush2.bf16.msra.mxu0 %v1558
    %1917 = vmatprep.subr.bf16.mxu0 %v1553
    %1918 = vmatpush2.bf16.msra.mxu0 %v1552
    %1919 = vmatprep.subr.bf16.mxu0 %v1547
    %1920 = vmatpush2.bf16.msra.mxu0 %v1546
    %1921 = vmatprep.subr.bf16.mxu0 %v1541
    %1922 = vmatpush2.bf16.msra.mxu0 %v1540
    %1923 = vmatprep.subr.bf16.mxu0 %v1535
    %1924 = vmatpush2.bf16.msra.mxu0 %v1534
    %1925 = vmatprep.subr.bf16.mxu0 %v1529
    %1926 = vmatpush2.bf16.msra.mxu0 %v1528
    %1927 = vmatprep.mubr.bf16.mxu0 %v581
    %1928 = vmatmul.mubr.bf16.gmra.mxu0 %v580
    %v1929 = vpop.f32.mrf.mxu0
    %v1930 = vadd.f32 %v1887, %v1929
    %v1931 = vpop.f32.mrf.mxu0
    %v1932 = vadd.f32 %v1889, %v1931
    %v1933 = vpop.f32.mrf.mxu0
    %v1934 = vadd.f32 %v1891, %v1933
    %v1935 = vpop.f32.mrf.mxu0
    %v1936 = vadd.f32 %v1893, %v1935
    %1937 = vdwg.mxu0
    %1938 = vmatprep.subr.bf16.mxu0 %v1429
    %1939 = vmatpush1.bf16.msra.mxu0 %v1428
    %1940 = vmatprep.subr.bf16.mxu0 %v1423
    %1941 = vmatpush1.bf16.msra.mxu0 %v1422
    %1942 = vmatprep.subr.bf16.mxu0 %v1417
    %1943 = vmatpush1.bf16.msra.mxu0 %v1416
    %1944 = vmatprep.subr.bf16.mxu0 %v1411
    %1945 = vmatpush1.bf16.msra.mxu0 %v1410
    %1946 = vmatprep.subr.bf16.mxu0 %v1405
    %1947 = vmatpush1.bf16.msra.mxu0 %v1404
    %1948 = vmatprep.subr.bf16.mxu0 %v1399
    %1949 = vmatpush1.bf16.msra.mxu0 %v1398
    %1950 = vmatprep.subr.bf16.mxu0 %v1393
    %1951 = vmatpush1.bf16.msra.mxu0 %v1392
    %1952 = vmatprep.subr.bf16.mxu0 %v1387
    %1953 = vmatpush1.bf16.msra.mxu0 %v1386
    %1954 = vmatprep.subr.bf16.mxu0 %v1477
    %1955 = vmatpush2.bf16.msra.mxu0 %v1476
    %1956 = vmatprep.subr.bf16.mxu0 %v1471
    %1957 = vmatpush2.bf16.msra.mxu0 %v1470
    %1958 = vmatprep.subr.bf16.mxu0 %v1465
    %1959 = vmatpush2.bf16.msra.mxu0 %v1464
    %1960 = vmatprep.subr.bf16.mxu0 %v1459
    %1961 = vmatpush2.bf16.msra.mxu0 %v1458
    %1962 = vmatprep.subr.bf16.mxu0 %v1453
    %1963 = vmatpush2.bf16.msra.mxu0 %v1452
    %1964 = vmatprep.subr.bf16.mxu0 %v1447
    %1965 = vmatpush2.bf16.msra.mxu0 %v1446
    %1966 = vmatprep.subr.bf16.mxu0 %v1441
    %1967 = vmatpush2.bf16.msra.mxu0 %v1440
    %1968 = vmatprep.subr.bf16.mxu0 %v1435
    %1969 = vmatpush2.bf16.msra.mxu0 %v1434
    %1970 = vmatprep.mubr.bf16.mxu0 %v579
    %1971 = vmatmul.mubr.bf16.gmra.mxu0 %v578
    %v1972 = vpop.f32.mrf.mxu0
    %v1973 = vadd.f32 %v795, %v1972
    %v1974 = vpop.f32.mrf.mxu0
    %v1975 = vadd.f32 %v799, %v1974
    %v1976 = vpop.f32.mrf.mxu0
    %v1977 = vadd.f32 %v795, %v1976
    %v1978 = vpop.f32.mrf.mxu0
    %v1979 = vadd.f32 %v799, %v1978
    %1980 = vdwg.mxu0
    %1981 = vmatprep.subr.bf16.mxu0 %v1525
    %1982 = vmatpush1.bf16.msra.mxu0 %v1524
    %1983 = vmatprep.subr.bf16.mxu0 %v1519
    %1984 = vmatpush1.bf16.msra.mxu0 %v1518
    %1985 = vmatprep.subr.bf16.mxu0 %v1513
    %1986 = vmatpush1.bf16.msra.mxu0 %v1512
    %1987 = vmatprep.subr.bf16.mxu0 %v1507
    %1988 = vmatpush1.bf16.msra.mxu0 %v1506
    %1989 = vmatprep.subr.bf16.mxu0 %v1501
    %1990 = vmatpush1.bf16.msra.mxu0 %v1500
    %1991 = vmatprep.subr.bf16.mxu0 %v1495
    %1992 = vmatpush1.bf16.msra.mxu0 %v1494
    %1993 = vmatprep.subr.bf16.mxu0 %v1489
    %1994 = vmatpush1.bf16.msra.mxu0 %v1488
    %1995 = vmatprep.subr.bf16.mxu0 %v1483
    %1996 = vmatpush1.bf16.msra.mxu0 %v1482
    %1997 = vmatprep.subr.bf16.mxu0 %v1573
    %1998 = vmatpush2.bf16.msra.mxu0 %v1572
    %1999 = vmatprep.subr.bf16.mxu0 %v1567
    %2000 = vmatpush2.bf16.msra.mxu0 %v1566
    %2001 = vmatprep.subr.bf16.mxu0 %v1561
    %2002 = vmatpush2.bf16.msra.mxu0 %v1560
    %2003 = vmatprep.subr.bf16.mxu0 %v1555
    %2004 = vmatpush2.bf16.msra.mxu0 %v1554
    %2005 = vmatprep.subr.bf16.mxu0 %v1549
    %2006 = vmatpush2.bf16.msra.mxu0 %v1548
    %2007 = vmatprep.subr.bf16.mxu0 %v1543
    %2008 = vmatpush2.bf16.msra.mxu0 %v1542
    %2009 = vmatprep.subr.bf16.mxu0 %v1537
    %2010 = vmatpush2.bf16.msra.mxu0 %v1536
    %2011 = vmatprep.subr.bf16.mxu0 %v1531
    %2012 = vmatpush2.bf16.msra.mxu0 %v1530
    %2013 = vmatprep.mubr.bf16.mxu0 %v581
    %2014 = vmatmul.mubr.bf16.gmra.mxu0 %v580
    %v2015 = vpop.f32.mrf.mxu0
    %v2016 = vadd.f32 %v1973, %v2015
    %v2017 = vpop.f32.mrf.mxu0
    %v2018 = vadd.f32 %v1975, %v2017
    %v2019 = vpop.f32.mrf.mxu0
    %v2020 = vadd.f32 %v1977, %v2019
    %v2021 = vpop.f32.mrf.mxu0
    %v2022 = vadd.f32 %v1979, %v2021
    %2023 = vdwg.mxu0
    %v2024 = vmax.f32 %v1844, 0.0
    %v2025 = vmax.f32 %v1846, 0.0
    %v2026 = vmax.f32 %v1930, 0.0
    %v2027 = vmax.f32 %v1932, 0.0
    %v2028 = vmax.f32 %v2016, 0.0
    %v2029 = vmax.f32 %v2018, 0.0
    %v2030 = vmax.f32 %v1848, 0.0
    %v2031 = vmax.f32 %v1850, 0.0
    %v2032 = vmax.f32 %v1934, 0.0
    %v2033 = vmax.f32 %v1936, 0.0
    %v2034 = vmax.f32 %v2020, 0.0
    %v2035 = vmax.f32 %v2022, 0.0
    %v2036 = vpack.c.bf16 %v2030, %v2024
    %v2037 = vpack.c.bf16 %v2031, %v2025
    %v2038 = vpack.c.bf16 %v2032, %v2026
    %v2039 = vpack.c.bf16 %v2033, %v2027
    %v2040 = vpack.c.bf16 %v2034, %v2028
    %v2041 = vpack.c.bf16 %v2035, %v2029
    %v2042 = vld [vmem:[#allocation6] sm:$0xf]
    %v2043 = vld [vmem:[#allocation6 + $0x4] sm:$0xf]
    %v2044 = vld [vmem:[#allocation6 + $0x8] sm:$0xf]
    %v2045 = vld [vmem:[#allocation6 + $0xc] sm:$0xf]
    %v2046 = vld [vmem:[#allocation6 + $0x10] sm:$0xf]
    %v2047 = vld [vmem:[#allocation6 + $0x14] sm:$0xf]
    %v2048 = vld [vmem:[#allocation6 + $0x18] sm:$0xf]
    %v2049 = vld [vmem:[#allocation6 + $0x1c] sm:$0xf]
    %v2050 = vld [vmem:[#allocation6 + $0x20] sm:$0xf]
    %v2051 = vld [vmem:[#allocation6 + $0x24] sm:$0xf]
    %v2052 = vld [vmem:[#allocation6 + $0x28] sm:$0xf]
    %v2053 = vld [vmem:[#allocation6 + $0x2c] sm:$0xf]
    %v2054 = vld [vmem:[#allocation6 + $0x30] sm:$0xf]
    %v2055 = vld [vmem:[#allocation6 + $0x34] sm:$0xf]
    %v2056 = vld [vmem:[#allocation6 + $0x38] sm:$0xf]
    %v2057 = vld [vmem:[#allocation6 + $0x3c] sm:$0xf]
    %v2058 = vld [vmem:[#allocation6 + $0x40] sm:$0xf]
    %v2059 = vld [vmem:[#allocation6 + $0x44] sm:$0xf]
    %v2060 = vld [vmem:[#allocation6 + $0x48] sm:$0xf]
    %v2061 = vld [vmem:[#allocation6 + $0x4c] sm:$0xf]
    %v2062 = vld [vmem:[#allocation6 + $0x50] sm:$0xf]
    %v2063 = vld [vmem:[#allocation6 + $0x54] sm:$0xf]
    %v2064 = vld [vmem:[#allocation6 + $0x58] sm:$0xf]
    %v2065 = vld [vmem:[#allocation6 + $0x5c] sm:$0xf]
    %v2066 = vld [vmem:[#allocation6 + $0x60] sm:$0xf]
    %v2067 = vld [vmem:[#allocation6 + $0x64] sm:$0xf]
    %v2068 = vld [vmem:[#allocation6 + $0x68] sm:$0xf]
    %v2069 = vld [vmem:[#allocation6 + $0x6c] sm:$0xf]
    %v2070 = vld [vmem:[#allocation6 + $0x70] sm:$0xf]
    %v2071 = vld [vmem:[#allocation6 + $0x74] sm:$0xf]
    %v2072 = vld [vmem:[#allocation6 + $0x78] sm:$0xf]
    %v2073 = vld [vmem:[#allocation6 + $0x7c] sm:$0xf]
    %v2074 = vld [vmem:[#allocation6 + $0x80] sm:$0xf]
    %v2075 = vld [vmem:[#allocation6 + $0x84] sm:$0xf]
    %v2076 = vld [vmem:[#allocation6 + $0x88] sm:$0xf]
    %v2077 = vld [vmem:[#allocation6 + $0x8c] sm:$0xf]
    %v2078 = vld [vmem:[#allocation6 + $0x90] sm:$0xf]
    %v2079 = vld [vmem:[#allocation6 + $0x94] sm:$0xf]
    %v2080 = vld [vmem:[#allocation6 + $0x98] sm:$0xf]
    %v2081 = vld [vmem:[#allocation6 + $0x9c] sm:$0xf]
    %v2082 = vld [vmem:[#allocation6 + $0xa0] sm:$0xf]
    %v2083 = vld [vmem:[#allocation6 + $0xa4] sm:$0xf]
    %v2084 = vld [vmem:[#allocation6 + $0xa8] sm:$0xf]
    %v2085 = vld [vmem:[#allocation6 + $0xac] sm:$0xf]
    %v2086 = vld [vmem:[#allocation6 + $0xb0] sm:$0xf]
    %v2087 = vld [vmem:[#allocation6 + $0xb4] sm:$0xf]
    %v2088 = vld [vmem:[#allocation6 + $0xb8] sm:$0xf]
    %v2089 = vld [vmem:[#allocation6 + $0xbc] sm:$0xf]
    %v2090 = vld [vmem:[#allocation6 + $0xc0] sm:$0xf]
    %v2091 = vld [vmem:[#allocation6 + $0xc4] sm:$0xf]
    %v2092 = vld [vmem:[#allocation6 + $0xc8] sm:$0xf]
    %v2093 = vld [vmem:[#allocation6 + $0xcc] sm:$0xf]
    %v2094 = vld [vmem:[#allocation6 + $0xd0] sm:$0xf]
    %v2095 = vld [vmem:[#allocation6 + $0xd4] sm:$0xf]
    %v2096 = vld [vmem:[#allocation6 + $0xd8] sm:$0xf]
    %v2097 = vld [vmem:[#allocation6 + $0xdc] sm:$0xf]
    %v2098 = vld [vmem:[#allocation6 + $0xe0] sm:$0xf]
    %v2099 = vld [vmem:[#allocation6 + $0xe4] sm:$0xf]
    %v2100 = vld [vmem:[#allocation6 + $0xe8] sm:$0xf]
    %v2101 = vld [vmem:[#allocation6 + $0xec] sm:$0xf]
    %v2102 = vld [vmem:[#allocation6 + $0xf0] sm:$0xf]
    %v2103 = vld [vmem:[#allocation6 + $0xf4] sm:$0xf]
    %v2104 = vld [vmem:[#allocation6 + $0xf8] sm:$0xf]
    %v2105 = vld [vmem:[#allocation6 + $0xfc] sm:$0xf]
    %v2106 = vld [vmem:[#allocation6 + $0x100] sm:$0xf]
    %v2107 = vld [vmem:[#allocation6 + $0x104] sm:$0xf]
    %v2108 = vld [vmem:[#allocation6 + $0x108] sm:$0xf]
    %v2109 = vld [vmem:[#allocation6 + $0x10c] sm:$0xf]
    %v2110 = vld [vmem:[#allocation6 + $0x110] sm:$0xf]
    %v2111 = vld [vmem:[#allocation6 + $0x114] sm:$0xf]
    %v2112 = vld [vmem:[#allocation6 + $0x118] sm:$0xf]
    %v2113 = vld [vmem:[#allocation6 + $0x11c] sm:$0xf]
    %v2114 = vld [vmem:[#allocation6 + $0x120] sm:$0xf]
    %v2115 = vld [vmem:[#allocation6 + $0x124] sm:$0xf]
    %v2116 = vld [vmem:[#allocation6 + $0x128] sm:$0xf]
    %v2117 = vld [vmem:[#allocation6 + $0x12c] sm:$0xf]
    %v2118 = vld [vmem:[#allocation6 + $0x130] sm:$0xf]
    %v2119 = vld [vmem:[#allocation6 + $0x134] sm:$0xf]
    %v2120 = vld [vmem:[#allocation6 + $0x138] sm:$0xf]
    %v2121 = vld [vmem:[#allocation6 + $0x13c] sm:$0xf]
    %v2122 = vld [vmem:[#allocation6 + $0x140] sm:$0xf]
    %v2123 = vld [vmem:[#allocation6 + $0x144] sm:$0xf]
    %v2124 = vld [vmem:[#allocation6 + $0x148] sm:$0xf]
    %v2125 = vld [vmem:[#allocation6 + $0x14c] sm:$0xf]
    %v2126 = vld [vmem:[#allocation6 + $0x150] sm:$0xf]
    %v2127 = vld [vmem:[#allocation6 + $0x154] sm:$0xf]
    %v2128 = vld [vmem:[#allocation6 + $0x158] sm:$0xf]
    %v2129 = vld [vmem:[#allocation6 + $0x15c] sm:$0xf]
    %v2130 = vld [vmem:[#allocation6 + $0x160] sm:$0xf]
    %v2131 = vld [vmem:[#allocation6 + $0x164] sm:$0xf]
    %v2132 = vld [vmem:[#allocation6 + $0x168] sm:$0xf]
    %v2133 = vld [vmem:[#allocation6 + $0x16c] sm:$0xf]
    %v2134 = vld [vmem:[#allocation6 + $0x170] sm:$0xf]
    %v2135 = vld [vmem:[#allocation6 + $0x174] sm:$0xf]
    %v2136 = vld [vmem:[#allocation6 + $0x178] sm:$0xf]
    %v2137 = vld [vmem:[#allocation6 + $0x17c] sm:$0xf]
    %v2138 = vld [vmem:[%s6] sm:$0x1]
    %v2140 = vlaneseq
    %v2141 = vshrl.u32 %v2140, 7
    %v2142 = vsub.s32 0, %v2141
    %v2143 = vrot.slane %v2138, %v2142
    %v2241 = vunpack.c.l.b16 %v2042
    %v2242 = vunpack.c.l.b16 %v2043
    %v2243 = vunpack.c.l.b16 %v2044
    %v2244 = vunpack.c.l.b16 %v2045
    %v2245 = vunpack.c.l.b16 %v2046
    %v2246 = vunpack.c.l.b16 %v2047
    %v2247 = vunpack.c.l.b16 %v2048
    %v2248 = vunpack.c.l.b16 %v2049
    %v2249 = vunpack.c.l.b16 %v2050
    %v2250 = vunpack.c.l.b16 %v2051
    %v2251 = vunpack.c.l.b16 %v2052
    %v2252 = vunpack.c.l.b16 %v2053
    %v2253 = vunpack.c.l.b16 %v2054
    %v2254 = vunpack.c.l.b16 %v2055
    %v2255 = vunpack.c.l.b16 %v2056
    %v2256 = vunpack.c.l.b16 %v2057
    %v2257 = vunpack.c.l.b16 %v2058
    %v2258 = vunpack.c.l.b16 %v2059
    %v2259 = vunpack.c.l.b16 %v2060
    %v2260 = vunpack.c.l.b16 %v2061
    %v2261 = vunpack.c.l.b16 %v2062
    %v2262 = vunpack.c.l.b16 %v2063
    %v2263 = vunpack.c.l.b16 %v2064
    %v2264 = vunpack.c.l.b16 %v2065
    %v2265 = vunpack.c.l.b16 %v2066
    %v2266 = vunpack.c.l.b16 %v2067
    %v2267 = vunpack.c.l.b16 %v2068
    %v2268 = vunpack.c.l.b16 %v2069
    %v2269 = vunpack.c.l.b16 %v2070
    %v2270 = vunpack.c.l.b16 %v2071
    %v2271 = vunpack.c.l.b16 %v2072
    %v2272 = vunpack.c.l.b16 %v2073
    %v2273 = vunpack.c.l.b16 %v2074
    %v2274 = vunpack.c.l.b16 %v2075
    %v2275 = vunpack.c.l.b16 %v2076
    %v2276 = vunpack.c.l.b16 %v2077
    %v2277 = vunpack.c.l.b16 %v2078
    %v2278 = vunpack.c.l.b16 %v2079
    %v2279 = vunpack.c.l.b16 %v2080
    %v2280 = vunpack.c.l.b16 %v2081
    %v2281 = vunpack.c.l.b16 %v2082
    %v2282 = vunpack.c.l.b16 %v2083
    %v2283 = vunpack.c.l.b16 %v2084
    %v2284 = vunpack.c.l.b16 %v2085
    %v2285 = vunpack.c.l.b16 %v2086
    %v2286 = vunpack.c.l.b16 %v2087
    %v2287 = vunpack.c.l.b16 %v2088
    %v2288 = vunpack.c.l.b16 %v2089
    %v2289 = vunpack.c.l.b16 %v2090
    %v2290 = vunpack.c.l.b16 %v2091
    %v2291 = vunpack.c.l.b16 %v2092
    %v2292 = vunpack.c.l.b16 %v2093
    %v2293 = vunpack.c.l.b16 %v2094
    %v2294 = vunpack.c.l.b16 %v2095
    %v2295 = vunpack.c.l.b16 %v2096
    %v2296 = vunpack.c.l.b16 %v2097
    %v2297 = vunpack.c.l.b16 %v2098
    %v2298 = vunpack.c.l.b16 %v2099
    %v2299 = vunpack.c.l.b16 %v2100
    %v2300 = vunpack.c.l.b16 %v2101
    %v2301 = vunpack.c.l.b16 %v2102
    %v2302 = vunpack.c.l.b16 %v2103
    %v2303 = vunpack.c.l.b16 %v2104
    %v2304 = vunpack.c.l.b16 %v2105
    %v2305 = vunpack.c.l.b16 %v2106
    %v2306 = vunpack.c.l.b16 %v2107
    %v2307 = vunpack.c.l.b16 %v2108
    %v2308 = vunpack.c.l.b16 %v2109
    %v2309 = vunpack.c.l.b16 %v2110
    %v2310 = vunpack.c.l.b16 %v2111
    %v2311 = vunpack.c.l.b16 %v2112
    %v2312 = vunpack.c.l.b16 %v2113
    %v2313 = vunpack.c.l.b16 %v2114
    %v2314 = vunpack.c.l.b16 %v2115
    %v2315 = vunpack.c.l.b16 %v2116
    %v2316 = vunpack.c.l.b16 %v2117
    %v2317 = vunpack.c.l.b16 %v2118
    %v2318 = vunpack.c.l.b16 %v2119
    %v2319 = vunpack.c.l.b16 %v2120
    %v2320 = vunpack.c.l.b16 %v2121
    %v2321 = vunpack.c.l.b16 %v2122
    %v2322 = vunpack.c.l.b16 %v2123
    %v2323 = vunpack.c.l.b16 %v2124
    %v2324 = vunpack.c.l.b16 %v2125
    %v2325 = vunpack.c.l.b16 %v2126
    %v2326 = vunpack.c.l.b16 %v2127
    %v2327 = vunpack.c.l.b16 %v2128
    %v2328 = vunpack.c.l.b16 %v2129
    %v2329 = vunpack.c.l.b16 %v2130
    %v2330 = vunpack.c.l.b16 %v2131
    %v2331 = vunpack.c.l.b16 %v2132
    %v2332 = vunpack.c.l.b16 %v2133
    %v2333 = vunpack.c.l.b16 %v2134
    %v2334 = vunpack.c.l.b16 %v2135
    %v2335 = vunpack.c.l.b16 %v2136
    %v2336 = vunpack.c.l.b16 %v2137
    %v2337 = vpack.c.b16 %v2242, %v2241
    %v2338 = vpack.c.b16 %v2244, %v2243
    %v2339 = vpack.c.b16 %v2246, %v2245
    %v2340 = vpack.c.b16 %v2248, %v2247
    %v2341 = vpack.c.b16 %v2250, %v2249
    %v2342 = vpack.c.b16 %v2252, %v2251
    %v2343 = vpack.c.b16 %v2254, %v2253
    %v2344 = vpack.c.b16 %v2256, %v2255
    %v2345 = vpack.c.b16 %v2258, %v2257
    %v2346 = vpack.c.b16 %v2260, %v2259
    %v2347 = vpack.c.b16 %v2262, %v2261
    %v2348 = vpack.c.b16 %v2264, %v2263
    %v2349 = vpack.c.b16 %v2266, %v2265
    %v2350 = vpack.c.b16 %v2268, %v2267
    %v2351 = vpack.c.b16 %v2270, %v2269
    %v2352 = vpack.c.b16 %v2272, %v2271
    %v2353 = vpack.c.b16 %v2274, %v2273
    %v2354 = vpack.c.b16 %v2276, %v2275
    %v2355 = vpack.c.b16 %v2278, %v2277
    %v2356 = vpack.c.b16 %v2280, %v2279
    %v2357 = vpack.c.b16 %v2282, %v2281
    %v2358 = vpack.c.b16 %v2284, %v2283
    %v2359 = vpack.c.b16 %v2286, %v2285
    %v2360 = vpack.c.b16 %v2288, %v2287
    %v2361 = vpack.c.b16 %v2290, %v2289
    %v2362 = vpack.c.b16 %v2292, %v2291
    %v2363 = vpack.c.b16 %v2294, %v2293
    %v2364 = vpack.c.b16 %v2296, %v2295
    %v2365 = vpack.c.b16 %v2298, %v2297
    %v2366 = vpack.c.b16 %v2300, %v2299
    %v2367 = vpack.c.b16 %v2302, %v2301
    %v2368 = vpack.c.b16 %v2304, %v2303
    %v2369 = vpack.c.b16 %v2306, %v2305
    %v2370 = vpack.c.b16 %v2308, %v2307
    %v2371 = vpack.c.b16 %v2310, %v2309
    %v2372 = vpack.c.b16 %v2312, %v2311
    %v2373 = vpack.c.b16 %v2314, %v2313
    %v2374 = vpack.c.b16 %v2316, %v2315
    %v2375 = vpack.c.b16 %v2318, %v2317
    %v2376 = vpack.c.b16 %v2320, %v2319
    %v2377 = vpack.c.b16 %v2322, %v2321
    %v2378 = vpack.c.b16 %v2324, %v2323
    %v2379 = vpack.c.b16 %v2326, %v2325
    %v2380 = vpack.c.b16 %v2328, %v2327
    %v2381 = vpack.c.b16 %v2330, %v2329
    %v2382 = vpack.c.b16 %v2332, %v2331
    %v2383 = vpack.c.b16 %v2334, %v2333
    %v2384 = vpack.c.b16 %v2336, %v2335
    %2433 = vmatprep.subr.bf16.mxu0 0
    %2434 = vmatpush1.bf16.msra.mxu0 %v2344
    %2435 = vmatprep.subr.bf16.mxu0 0
    %2436 = vmatpush1.bf16.msra.mxu0 %v2343
    %2437 = vmatprep.subr.bf16.mxu0 0
    %2438 = vmatpush1.bf16.msra.mxu0 %v2342
    %2439 = vmatprep.subr.bf16.mxu0 0
    %2440 = vmatpush1.bf16.msra.mxu0 %v2341
    %2441 = vmatprep.subr.bf16.mxu0 0
    %2442 = vmatpush1.bf16.msra.mxu0 %v2340
    %2443 = vmatprep.subr.bf16.mxu0 0
    %2444 = vmatpush1.bf16.msra.mxu0 %v2339
    %2445 = vmatprep.subr.bf16.mxu0 0
    %2446 = vmatpush1.bf16.msra.mxu0 %v2338
    %2447 = vmatprep.subr.bf16.mxu0 0
    %2448 = vmatpush1.bf16.msra.mxu0 %v2337
    %2449 = vmatprep.subr.bf16.mxu0 0
    %2450 = vmatpush2.bf16.msra.mxu0 %v2352
    %2451 = vmatprep.subr.bf16.mxu0 0
    %2452 = vmatpush2.bf16.msra.mxu0 %v2351
    %2453 = vmatprep.subr.bf16.mxu0 0
    %2454 = vmatpush2.bf16.msra.mxu0 %v2350
    %2455 = vmatprep.subr.bf16.mxu0 0
    %2456 = vmatpush2.bf16.msra.mxu0 %v2349
    %2457 = vmatprep.subr.bf16.mxu0 0
    %2458 = vmatpush2.bf16.msra.mxu0 %v2348
    %2459 = vmatprep.subr.bf16.mxu0 0
    %2460 = vmatpush2.bf16.msra.mxu0 %v2347
    %2461 = vmatprep.subr.bf16.mxu0 0
    %2462 = vmatpush2.bf16.msra.mxu0 %v2346
    %2463 = vmatprep.subr.bf16.mxu0 0
    %2464 = vmatpush2.bf16.msra.mxu0 %v2345
    %2465 = vmatprep.mubr.bf16.mxu0 %v2037
    %2466 = vmatmul.mubr.bf16.gmra.mxu0 %v2036
    %v2467 = vpop.f32.mrf.mxu0
    %v2468 = vadd.f32 %v2143, %v2467
    %v2469 = vpop.f32.mrf.mxu0
    %v2470 = vpop.f32.mrf.mxu0
    %v2471 = vadd.f32 %v2143, %v2470
    %v2472 = vpop.f32.mrf.mxu0
    %2473 = vdwg.mxu0
    %2474 = vmatprep.subr.bf16.mxu0 0
    %2475 = vmatpush1.bf16.msra.mxu0 %v2360
    %2476 = vmatprep.subr.bf16.mxu0 0
    %2477 = vmatpush1.bf16.msra.mxu0 %v2359
    %2478 = vmatprep.subr.bf16.mxu0 0
    %2479 = vmatpush1.bf16.msra.mxu0 %v2358
    %2480 = vmatprep.subr.bf16.mxu0 0
    %2481 = vmatpush1.bf16.msra.mxu0 %v2357
    %2482 = vmatprep.subr.bf16.mxu0 0
    %2483 = vmatpush1.bf16.msra.mxu0 %v2356
    %2484 = vmatprep.subr.bf16.mxu0 0
    %2485 = vmatpush1.bf16.msra.mxu0 %v2355
    %2486 = vmatprep.subr.bf16.mxu0 0
    %2487 = vmatpush1.bf16.msra.mxu0 %v2354
    %2488 = vmatprep.subr.bf16.mxu0 0
    %2489 = vmatpush1.bf16.msra.mxu0 %v2353
    %2490 = vmatprep.subr.bf16.mxu0 0
    %2491 = vmatpush2.bf16.msra.mxu0 %v2368
    %2492 = vmatprep.subr.bf16.mxu0 0
    %2493 = vmatpush2.bf16.msra.mxu0 %v2367
    %2494 = vmatprep.subr.bf16.mxu0 0
    %2495 = vmatpush2.bf16.msra.mxu0 %v2366
    %2496 = vmatprep.subr.bf16.mxu0 0
    %2497 = vmatpush2.bf16.msra.mxu0 %v2365
    %2498 = vmatprep.subr.bf16.mxu0 0
    %2499 = vmatpush2.bf16.msra.mxu0 %v2364
    %2500 = vmatprep.subr.bf16.mxu0 0
    %2501 = vmatpush2.bf16.msra.mxu0 %v2363
    %2502 = vmatprep.subr.bf16.mxu0 0
    %2503 = vmatpush2.bf16.msra.mxu0 %v2362
    %2504 = vmatprep.subr.bf16.mxu0 0
    %2505 = vmatpush2.bf16.msra.mxu0 %v2361
    %2506 = vmatprep.mubr.bf16.mxu0 %v2039
    %2507 = vmatmul.mubr.bf16.gmra.mxu0 %v2038
    %v2508 = vpop.f32.mrf.mxu0
    %v2509 = vadd.f32 %v2468, %v2508
    %v2510 = vpop.f32.mrf.mxu0
    %v2511 = vpop.f32.mrf.mxu0
    %v2512 = vadd.f32 %v2471, %v2511
    %v2513 = vpop.f32.mrf.mxu0
    %2514 = vdwg.mxu0
    %2515 = vmatprep.subr.bf16.mxu0 0
    %2516 = vmatpush1.bf16.msra.mxu0 %v2376
    %2517 = vmatprep.subr.bf16.mxu0 0
    %2518 = vmatpush1.bf16.msra.mxu0 %v2375
    %2519 = vmatprep.subr.bf16.mxu0 0
    %2520 = vmatpush1.bf16.msra.mxu0 %v2374
    %2521 = vmatprep.subr.bf16.mxu0 0
    %2522 = vmatpush1.bf16.msra.mxu0 %v2373
    %2523 = vmatprep.subr.bf16.mxu0 0
    %2524 = vmatpush1.bf16.msra.mxu0 %v2372
    %2525 = vmatprep.subr.bf16.mxu0 0
    %2526 = vmatpush1.bf16.msra.mxu0 %v2371
    %2527 = vmatprep.subr.bf16.mxu0 0
    %2528 = vmatpush1.bf16.msra.mxu0 %v2370
    %2529 = vmatprep.subr.bf16.mxu0 0
    %2530 = vmatpush1.bf16.msra.mxu0 %v2369
    %2531 = vmatprep.subr.bf16.mxu0 0
    %2532 = vmatpush2.bf16.msra.mxu0 %v2384
    %2533 = vmatprep.subr.bf16.mxu0 0
    %2534 = vmatpush2.bf16.msra.mxu0 %v2383
    %2535 = vmatprep.subr.bf16.mxu0 0
    %2536 = vmatpush2.bf16.msra.mxu0 %v2382
    %2537 = vmatprep.subr.bf16.mxu0 0
    %2538 = vmatpush2.bf16.msra.mxu0 %v2381
    %2539 = vmatprep.subr.bf16.mxu0 0
    %2540 = vmatpush2.bf16.msra.mxu0 %v2380
    %2541 = vmatprep.subr.bf16.mxu0 0
    %2542 = vmatpush2.bf16.msra.mxu0 %v2379
    %2543 = vmatprep.subr.bf16.mxu0 0
    %2544 = vmatpush2.bf16.msra.mxu0 %v2378
    %2545 = vmatprep.subr.bf16.mxu0 0
    %2546 = vmatpush2.bf16.msra.mxu0 %v2377
    %2547 = vmatprep.mubr.bf16.mxu0 %v2041
    %2548 = vmatmul.mubr.bf16.gmra.mxu0 %v2040
    %v2549 = vpop.f32.mrf.mxu0
    %v2550 = vadd.f32 %v2509, %v2549
    %v2551 = vpop.f32.mrf.mxu0
    %v2552 = vpop.f32.mrf.mxu0
    %v2553 = vadd.f32 %v2512, %v2552
    %v2554 = vpop.f32.mrf.mxu0
    %2555 = vdwg.mxu0
    %2556 = vst [vmem:[%s7] sm:$0xff] %v2550
    %2557 = vst [vmem:[%s7 + $0x8] sm:$0xff] %v2553
    // Predicated region
    $region42: #{_aux_head_call.1} parent=1 // pred_check
      _
    $region43: #{_aux_head_call.1} parent=1 // pred_check_branch
      %2559 = sbr.rel (0) target = $region45
    $region44: #{_aux_head_call.1} parent=1 // pred_region
      _
    $region45: #{_aux_head_call.1} parent=1 // pred_fallthru
      _
    // Predicated region
    $region46: #{_aux_head_call.1} parent=1 // pred_check
      _
    $region47: #{_aux_head_call.1} parent=1 // pred_check_branch
      %2561 = sbr.rel (0) target = $region49
    $region48: #{_aux_head_call.1} parent=1 // pred_region
      _
    $region49: #{_aux_head_call.1} parent=1 // pred_fallthru
      _
    %2562 = vsyncpa [#allocation3], 1
    %2563 = vsyncpa [#allocation5], 1

</llo_original>
